<compile_context>
chip_gen: v5e
topology: v5e:2x2
jax: 0.10.0
libtpu: 0.0.40
codegen_flags: <defaults>
</compile_context>

<pallas_src>
import math

import jax
import jax.numpy as jnp
from jax import lax
from jax.experimental import pallas as pl
from jax.experimental.pallas import tpu as pltpu


_PAD_COORD = 1.0e6  # sentinel coordinate for padded pixels: fails every window test


def _use_bf16_exp():
    """bf16 EUP exp only on generations with a bf16 EUP (v6e / v7x)."""
    try:
        kind = jax.devices()[0].device_kind.lower()
    except Exception:
        return False
    return ("v6" in kind) or ("v7" in kind)


# ----------------------------------------------------------------------------
# Glue: separable Gaussian smoothing (scipy.ndimage.gaussian_filter,
# mode='reflect', truncate=4.0, spatial axes only).
# ----------------------------------------------------------------------------
def _gaussian_smooth(img, sigma):
    """img: (C, H, W) float32."""
    if sigma <= 0:
        return img
    radius = int(4.0 * sigma + 0.5)
    x = jnp.arange(-radius, radius + 1, dtype=jnp.float32)
    k = jnp.exp(-0.5 * (x / sigma) ** 2)
    k = k / jnp.sum(k)

    def conv_axis(a, axis):
        pad = [(0, 0)] * a.ndim
        pad[axis] = (radius, radius)
        ap = jnp.pad(a, pad, mode="symmetric")  # scipy 'reflect'
        out = jnp.zeros_like(a)
        for t in range(2 * radius + 1):
            out = out + k[t] * lax.slice_in_dim(ap, t, t + a.shape[axis], axis=axis)
        return out

    return conv_axis(conv_axis(img, 1), 2)


def _pick_tiles(n, batch):
    """(TQ, TK): query tile large & lane-dense, candidate tile small."""
    tq = 512
    n128 = 128 * ((n + 127) // 128)
    while tq > 128 and tq >= 2 * n128:            # don't over-pad tiny images
        tq //= 2
    while tq > 128 and batch * ((n + tq - 1) // tq) < 2:
        tq //= 2                                  # >=2 parallel cells for v7x's 2 TCs
    tk = min(256, tq)                             # TK | TQ always holds
    return tq, tk


def _candidate_band(H, W, N, NP, TQ, TK, win_rad):
    """Static per-query-tile candidate-tile band (row-window pruning)."""
    nq = NP // TQ
    nk = NP // TK
    k_lo, k_hi = [], []
    for qi in range(nq):
        q0 = qi * TQ
        q1 = min(q0 + TQ, N) - 1
        rmin, rmax = q0 // W, q1 // W
        lo_idx = max(rmin - win_rad, 0) * W
        hi_idx = min(rmax + win_rad, H - 1) * W + (W - 1)
        k_lo.append(lo_idx // TK)
        k_hi.append(hi_idx // TK)
    nk_band = min(max(h - l + 1 for l, h in zip(k_lo, k_hi)), nk)
    ki_start = [min(max(l, 0), nk - nk_band) for l in k_lo]
    return jnp.asarray(ki_start, jnp.int32), nk_band


# ----------------------------------------------------------------------------
# Pallas kernels: quickshift core (Parzen density + nearest higher-density
# neighbour), tiled over (batch, query tile, band-local candidate tile).
# ----------------------------------------------------------------------------
def _quickshift_parents(feats_nd, feats_dn, H, W, n_valid, kernel_size,
                        max_dist, win_rad, TQ, TK):
    """feats_nd: (B, NP, DP) candidate-side layout; feats_dn: (B, DP, NP)
    lane-dense query-side layout.  Channels: 0..2 smoothed colors, 3 row,
    4 col, 5 density (filled for pass 2).  Returns parents (B, n_valid)."""
    B, NP, DP = feats_nd.shape
    nq = NP // TQ
    inv_ks2 = -0.5 / float(kernel_size * kernel_size)
    maxdist2 = float(max_dist) ** 2
    wr = float(win_rad)
    use_bf16 = _use_bf16_exp()

    ki_start, nk_band = _candidate_band(H, W, n_valid, NP, TQ, TK, win_rad)

    def win_and_d2(fk, fq):
        # fk: (TK, DP) candidate block; fq: (DP, TQ) lane-dense query block.
        rk, ck = fk[:, 3:4], fk[:, 4:5]                        # (TK, 1)
        rq, cq = fq[3:4, :], fq[4:5, :]                        # (1, TQ)
        dr, dc = rk - rq, ck - cq
        win = (jnp.abs(dr) <= wr) & (jnp.abs(dc) <= wr)
        # Exact spatial term on the VPU (no f32 cancellation on big coords);
        # color term via a tiny K=3 gram on the MXU.
        colk, colq = fk[:, 0:3], fq[0:3, :]                    # (TK,3), (3,TQ)
        g = lax.dot_general(colk, colq, (((1,), (0,)), ((), ())),
                            preferred_element_type=jnp.float32)  # (TK, TQ)
        sqk = jnp.sum(colk * colk, axis=1, keepdims=True)      # (TK, 1)
        sqq = jnp.sum(colq * colq, axis=0, keepdims=True)      # (1, TQ)
        d2 = jnp.maximum(sqk + sqq - 2.0 * g, 0.0) + dr * dr + dc * dc
        return d2, win

    cparams = pltpu.CompilerParams(
        dimension_semantics=("parallel", "parallel", "arbitrary"),
        vmem_limit_bytes=32 * 1024 * 1024)   # safe on v7x's 64 MiB VMEM per TC

    cand_spec = pl.BlockSpec((None, TK, DP),
                             lambda b, qi, ki, ks: (b, ks[qi] + ki, 0))
    query_spec = pl.BlockSpec((None, DP, TQ),
                              lambda b, qi, ki, ks: (b, 0, qi))
    row_spec = pl.BlockSpec((None, 1, TQ),
                            lambda b, qi, ki, ks: (b, 0, qi))

    # ---- pass 1: Parzen density per pixel (accumulate over band tiles) ------
    def dens_kernel(ks_ref, fk_ref, fq_ref, dens_ref):
        del ks_ref

        @pl.when(pl.program_id(2) == 0)
        def _():
            dens_ref[...] = jnp.zeros_like(dens_ref)

        d2, win = win_and_d2(fk_ref[...], fq_ref[...])
        arg = d2 * inv_ks2
        if use_bf16:   # v6e/v7x: packed-bf16 EUP exp (density sum stays f32)
            e = jnp.exp(arg.astype(jnp.bfloat16)).astype(jnp.float32)
        else:          # v5e: f32-only EUP
            e = jnp.exp(arg)
        dens_ref[...] += jnp.sum(jnp.where(win, e, 0.0), axis=0, keepdims=True)

    dens = pl.pallas_call(
        dens_kernel,
        out_shape=jax.ShapeDtypeStruct((B, 1, NP), jnp.float32),
        grid_spec=pltpu.PrefetchScalarGridSpec(
            num_scalar_prefetch=1,
            grid=(B, nq, nk_band),
            in_specs=[cand_spec, query_spec],
            out_specs=row_spec),
        compiler_params=cparams,
    )(ki_start, feats_nd, feats_dn)

    # Candidate-side density rides in feature channel 5 (no lane-padded (TK,1)
    # input block); query-side density stays a lane-dense (1, TQ) block.
    feats_nd2 = feats_nd.at[:, :, 5].set(dens[:, 0, :])

    # ---- pass 2: nearest neighbour with strictly higher density -------------
    def parent_kernel(ks_ref, fk_ref, fq_ref, densq_ref, parent_ref,
                      best_d2, best_idx):
        qi, ki = pl.program_id(1), pl.program_id(2)
        idx_q = qi * TQ + lax.broadcasted_iota(jnp.int32, (1, TQ), 1)

        @pl.when(ki == 0)
        def _():
            best_d2[...] = jnp.full((1, TQ), jnp.inf, jnp.float32)
            best_idx[...] = idx_q                  # default parent = self (root)

        fk = fk_ref[...]
        d2, win = win_and_d2(fk, fq_ref[...])
        higher = win & (fk[:, 5:6] > densq_ref[...])
        cand = jnp.where(higher, d2, jnp.inf)
        tile_min = jnp.min(cand, axis=0, keepdims=True)               # (1, TQ)
        k_tile = ks_ref[qi] + ki
        idx_k = k_tile * TK + lax.broadcasted_iota(jnp.int32, (TK, 1), 0)
        tile_arg = jnp.min(jnp.where(cand == tile_min, idx_k, NP),
                           axis=0, keepdims=True)                     # (1, TQ)
        # Online merge; strict < keeps the lowest-index tie-break across tiles
        # (band tiles are visited in increasing candidate-index order).
        better = tile_min < best_d2[...]
        best_idx[...] = jnp.where(better, tile_arg, best_idx[...])
        best_d2[...] = jnp.where(better, tile_min, best_d2[...])

        @pl.when(ki == pl.num_programs(2) - 1)
        def _():
            parent_ref[...] = jnp.where(best_d2[...] <= maxdist2,
                                        best_idx[...], idx_q).astype(jnp.int32)

    parent = pl.pallas_call(
        parent_kernel,
        out_shape=jax.ShapeDtypeStruct((B, 1, NP), jnp.int32),
        grid_spec=pltpu.PrefetchScalarGridSpec(
            num_scalar_prefetch=1,
            grid=(B, nq, nk_band),
            in_specs=[cand_spec, query_spec, row_spec],
            out_specs=row_spec,
            scratch_shapes=[pltpu.VMEM((1, TQ), jnp.float32),
                            pltpu.VMEM((1, TQ), jnp.int32)]),
        compiler_params=cparams,
    )(ki_start, feats_nd2, feats_dn, dens)

    return parent[:, 0, :n_valid]                                     # (B, N)


# ----------------------------------------------------------------------------
# Pallas kernel: one-hot encoding (F.one_hot + permute(0, 3, 1, 2)), int8 out,
# tiled over the pixel axis so large images stay within VMEM.
# ----------------------------------------------------------------------------
def _one_hot_nchw(labels_flat, num_classes, H, W):
    """labels_flat: (B, N) int32 -> (B, num_classes, H, W) int8 one-hot."""
    B, N = labels_flat.shape
    TN = min(8192, 128 * ((N + 127) // 128))      # lane-dense pixel tile
    NPH = TN * ((N + TN - 1) // TN)
    lab = jnp.full((B, 1, NPH), -1, jnp.int32).at[:, 0, :N].set(labels_flat)

    def kernel(lab_ref, out_ref):
        g = lax.broadcasted_iota(jnp.int32, (num_classes, TN), 0)
        out_ref[...] = (lab_ref[...] == g).astype(jnp.int8)

    oh = pl.pallas_call(
        kernel,
        out_shape=jax.ShapeDtypeStruct((B, num_classes, NPH), jnp.int8),
        grid=(B, NPH // TN),
        in_specs=[pl.BlockSpec((None, 1, TN), lambda b, t: (b, 0, t))],
        out_specs=pl.BlockSpec((None, num_classes, TN), lambda b, t: (b, 0, t)),
        compiler_params=pltpu.CompilerParams(
            dimension_semantics=("parallel", "parallel")),
    )(lab)
    return oh[:, :, :N].reshape(B, num_classes, H, W)


# ----------------------------------------------------------------------------
# Module port (no learnable parameters).
# ----------------------------------------------------------------------------
class QuickshiftGroups:
    """JAX/Pallas port of the PyTorch QuickshiftGroups module.

    Input:  x (B, C, H, W) float32, C in {1, 3}.
    Output: (B, max_groups, H, W) int8 one-hot (flat=False)
            or (B, H, W) int32 labels (flat=True).
    """

    def __init__(self, max_groups=16, kernel_size=8.0, max_dist=20.0,
                 sigma=1.0, flat=False):
        self.max_groups = int(max_groups)
        self.kernel_size = float(kernel_size)
        self.max_dist = float(max_dist)
        self.sigma = float(sigma)
        self.flat = flat

    def __call__(self, x):
        B, C, H, W = x.shape
        N = H * W
        if C == 1:
            x = jnp.tile(x, (1, 3, 1, 1))
        elif C != 3:
            raise ValueError(f"Invalid image shape: {x.shape}")

        # TODO(synk): skimage.quickshift converts RGB->CIELAB (convert2lab=True)
        # and adds tiny random noise to densities for tie-breaking; both skipped.
        smoothed = jax.vmap(lambda im: _gaussian_smooth(im, self.sigma))(
            x.astype(jnp.float32))                                     # (B,3,H,W)
        rr, cc = jnp.meshgrid(jnp.arange(H, dtype=jnp.float32),
                              jnp.arange(W, dtype=jnp.float32), indexing="ij")
        coords = jnp.broadcast_to(jnp.stack([rr, cc], 0)[None], (B, 2, H, W))
        feats = jnp.concatenate([smoothed, coords], axis=1).reshape(B, 5, N)

        # Pad feature dim to 8 (channel 5 later carries density) and pixel dim
        # to a multiple of TQ; padded pixels get huge coordinates so they never
        # fall inside any window.
        TQ, TK = _pick_tiles(N, B)
        NP = TQ * ((N + TQ - 1) // TQ)
        DP = 8
        feats_dn = jnp.zeros((B, DP, NP), jnp.float32)
        feats_dn = feats_dn.at[:, 3:5, N:].set(_PAD_COORD)
        feats_dn = feats_dn.at[:, :5, :N].set(feats)                  # (B,8,NP)
        feats_nd = feats_dn.transpose(0, 2, 1)                        # (B,NP,8)

        win_rad = int(math.ceil(3.0 * self.kernel_size))
        parent = _quickshift_parents(feats_nd, feats_dn, H, W, N,
                                     self.kernel_size, self.max_dist,
                                     win_rad, TQ, TK)                 # (B,N)

        # Flatten the parent forest (pointer jumping).
        iters = int(math.ceil(math.log2(max(N, 2)))) + 1
        for _ in range(iters):
            parent = jnp.take_along_axis(parent, parent, axis=1)

        # Relabel roots consecutively (np.unique(..., return_inverse=True)).
        def relabel(roots):
            present = jnp.zeros((N,), jnp.int32).at[roots].set(1)
            lbl_of_root = jnp.cumsum(present) - 1
            return lbl_of_root[roots], jnp.sum(present)

        labels, k = jax.vmap(relabel)(parent)                 # (B, N), (B,)
        # TODO(synk): relabel_segments_by_proximity is not provided in the source;
        # labels stay ordered by root pixel position (row-major) and are used as-is.

        def quantize(lab, kk):
            div_by = (jnp.max(lab).astype(jnp.float32) + 1.0) / self.max_groups
            q = jnp.floor(lab.astype(jnp.float32) / div_by).astype(jnp.int32)
            return jnp.where(kk > self.max_groups, q, lab)

        labels = jax.vmap(quantize)(labels, k)

        if self.flat:
            return labels.reshape(B, H, W)
        # Matches F.one_hot(...).permute(0, 3, 1, 2); int8 one-hot (cast at the
        # consumer if wider integers are required).
        return _one_hot_nchw(labels, self.max_groups, H, W)


if __name__ == "__main__":
    key = jax.random.PRNGKey(0)
    x = jax.random.uniform(key, (2, 3, 16, 16), dtype=jnp.float32)

    model = QuickshiftGroups(max_groups=16, kernel_size=8.0, max_dist=20.0,
                             sigma=1.0, flat=False)
    out = jax.block_until_ready(model(x))

    assert out.shape == (2, 16, 16, 16), out.shape
    assert out.dtype == jnp.int8
    # Each pixel belongs to exactly one group.
    assert bool(jnp.all(jnp.sum(out.astype(jnp.int32), axis=1) == 1))

    # Also exercise the flat path.
    flat = jax.block_until_ready(QuickshiftGroups(flat=True)(x))
    assert flat.shape == (2, 16, 16)
    assert bool(jnp.all((flat >= 0) & (flat < 16)))

    print("KERNEL_OK")
</pallas_src>

<mosaic_0001>
module attributes {stable_mosaic.version = 11 : i64} {
  func.func @dens_kernel(%arg0: i32, %arg1: i32, %arg2: i32, %arg3: memref<1xi32, #tpu.memory_space<smem>>, %arg4: memref<1x256x8xf32, #tpu.memory_space<vmem>>, %arg5: memref<1x8x256xf32, #tpu.memory_space<vmem>>, %arg6: memref<1x1x256xf32, #tpu.memory_space<vmem>>) attributes {dimension_semantics = [#tpu.dimension_semantics<parallel>, #tpu.dimension_semantics<parallel>, #tpu.dimension_semantics<arbitrary>], iteration_bounds = array<i64: 2, 1, 1>, scalar_prefetch = 1 : i64, scratch_operands = 0 : i64, tpu.core_type = #tpu.core_type<tc>, window_params = [{transform_indices = @transform_0, window_bounds = array<i64: 1, 256, 8>}, {transform_indices = @transform_1, window_bounds = array<i64: 1, 8, 256>}, {transform_indices = @transform_2, window_bounds = array<i64: 1, 1, 256>}]} {
    %c0_i32 = arith.constant 0 : i32
    %0 = arith.cmpi eq, %arg2, %c0_i32 : i32
    %1 = arith.extui %0 : i1 to i32
    %c0_i32_0 = arith.constant 0 : i32
    %2 = arith.cmpi ne, %1, %c0_i32_0 : i32
    scf.if %2 {
      %cst_21 = arith.constant 0.000000e+00 : f32
      %58 = vector.broadcast %cst_21 : f32 to vector<1x256xf32>
      %c0_22 = arith.constant 0 : index
      %c0_23 = arith.constant 0 : index
      %c0_24 = arith.constant 0 : index
      %59 = vector.load %arg6[%c0_22, %c0_23, %c0_24] : memref<1x1x256xf32, #tpu.memory_space<vmem>>, vector<1x1x256xf32>
      %60 = vector.shape_cast %59 : vector<1x1x256xf32> to vector<1x256xf32>
      %61 = vector.shape_cast %58 : vector<1x256xf32> to vector<1x1x256xf32>
      tpu.vector_store %arg6[%c0_22, %c0_23, %c0_24], %61 {strides = array<i32>} : memref<1x1x256xf32, #tpu.memory_space<vmem>>, vector<1x1x256xf32>,
    } else {
    }
    %c0 = arith.constant 0 : index
    %c0_1 = arith.constant 0 : index
    %c0_2 = arith.constant 0 : index
    %3 = vector.load %arg4[%c0, %c0_1, %c0_2] : memref<1x256x8xf32, #tpu.memory_space<vmem>>, vector<1x256x8xf32>
    %4 = vector.shape_cast %3 : vector<1x256x8xf32> to vector<256x8xf32>
    %c0_3 = arith.constant 0 : index
    %c0_4 = arith.constant 0 : index
    %c0_5 = arith.constant 0 : index
    %5 = vector.load %arg5[%c0_3, %c0_4, %c0_5] : memref<1x8x256xf32, #tpu.memory_space<vmem>>, vector<1x8x256xf32>
    %6 = vector.shape_cast %5 : vector<1x8x256xf32> to vector<8x256xf32>
    %7 = vector.extract_strided_slice %4 {offsets = [0, 3], sizes = [256, 1], strides = [1, 1]} : vector<256x8xf32> to vector<256x1xf32>
    %8 = vector.extract_strided_slice %4 {offsets = [0, 4], sizes = [256, 1], strides = [1, 1]} : vector<256x8xf32> to vector<256x1xf32>
    %9 = vector.extract_strided_slice %6 {offsets = [3, 0], sizes = [1, 256], strides = [1, 1]} : vector<8x256xf32> to vector<1x256xf32>
    %10 = vector.extract_strided_slice %6 {offsets = [4, 0], sizes = [1, 256], strides = [1, 1]} : vector<8x256xf32> to vector<1x256xf32>
    %11 = vector.broadcast %7 : vector<256x1xf32> to vector<256x256xf32>
    %12 = vector.broadcast %9 : vector<1x256xf32> to vector<256x256xf32>
    %13 = arith.subf %11, %12 : vector<256x256xf32>
    %14 = vector.broadcast %8 : vector<256x1xf32> to vector<256x256xf32>
    %15 = vector.broadcast %10 : vector<1x256xf32> to vector<256x256xf32>
    %16 = arith.subf %14, %15 : vector<256x256xf32>
    %17 = math.absf %13 : vector<256x256xf32>
    %cst = arith.constant 2.400000e+01 : f32
    %18 = vector.broadcast %cst : f32 to vector<256x256xf32>
    %19 = arith.cmpf ole, %17, %18 : vector<256x256xf32>
    %20 = math.absf %16 : vector<256x256xf32>
    %cst_6 = arith.constant 2.400000e+01 : f32
    %21 = vector.broadcast %cst_6 : f32 to vector<256x256xf32>
    %22 = arith.cmpf ole, %20, %21 : vector<256x256xf32>
    %23 = arith.andi %19, %22 : vector<256x256xi1>
    %24 = vector.extract_strided_slice %4 {offsets = [0, 0], sizes = [256, 3], strides = [1, 1]} : vector<256x8xf32> to vector<256x3xf32>
    %25 = vector.extract_strided_slice %6 {offsets = [0, 0], sizes = [3, 256], strides = [1, 1]} : vector<8x256xf32> to vector<3x256xf32>
    %cst_7 = arith.constant dense<0.000000e+00> : vector<256x256xf32>
    %26 = tpu.matmul %24, %25, %cst_7 {dimension_numbers = #tpu.dot_dimension_numbers<[1], [0], [0], [1], [0, 0, 1, 1], [], []>} : vector<256x3xf32>, vector<3x256xf32>, vector<256x256xf32> -> vector<256x256xf32>
    %27 = arith.mulf %24, %24 : vector<256x3xf32>
    %cst_8 = arith.constant dense<0.000000e+00> : vector<256xf32>
    %28 = vector.multi_reduction <add>, %27, %cst_8 [1] : vector<256x3xf32> to vector<256xf32>
    %29 = vector.shape_cast %28 : vector<256xf32> to vector<256x1xf32>
    %30 = arith.mulf %25, %25 : vector<3x256xf32>
    %cst_9 = arith.constant dense<0.000000e+00> : vector<256xf32>
    %31 = vector.multi_reduction <add>, %30, %cst_9 [0] : vector<3x256xf32> to vector<256xf32>
    %32 = vector.shape_cast %31 : vector<256xf32> to vector<1x256xf32>
    %33 = vector.broadcast %29 : vector<256x1xf32> to vector<256x256xf32>
    %34 = vector.broadcast %32 : vector<1x256xf32> to vector<256x256xf32>
    %35 = arith.addf %33, %34 : vector<256x256xf32>
    %cst_10 = arith.constant 2.000000e+00 : f32
    %36 = vector.broadcast %cst_10 : f32 to vector<256x256xf32>
    %37 = arith.mulf %36, %26 : vector<256x256xf32>
    %38 = arith.subf %35, %37 : vector<256x256xf32>
    %cst_11 = arith.constant 0.000000e+00 : f32
    %39 = vector.broadcast %cst_11 : f32 to vector<256x256xf32>
    %40 = arith.maximumf %38, %39 : vector<256x256xf32>
    %41 = arith.mulf %13, %13 : vector<256x256xf32>
    %42 = arith.addf %40, %41 : vector<256x256xf32>
    %43 = arith.mulf %16, %16 : vector<256x256xf32>
    %44 = arith.addf %42, %43 : vector<256x256xf32>
    %cst_12 = arith.constant -7.812500e-03 : f32
    %45 = vector.broadcast %cst_12 : f32 to vector<256x256xf32>
    %46 = arith.mulf %44, %45 : vector<256x256xf32>
    %47 = math.exp %46 : vector<256x256xf32>
    %c0_13 = arith.constant 0 : index
    %c0_14 = arith.constant 0 : index
    %c0_15 = arith.constant 0 : index
    %48 = vector.load %arg6[%c0_13, %c0_14, %c0_15] : memref<1x1x256xf32, #tpu.memory_space<vmem>>, vector<1x1x256xf32>
    %49 = vector.shape_cast %48 : vector<1x1x256xf32> to vector<1x256xf32>
    %cst_16 = arith.constant 0.000000e+00 : f32
    %50 = vector.broadcast %cst_16 : f32 to vector<256x256xf32>
    %51 = arith.select %23, %47, %50 : vector<256x256xi1>, vector<256x256xf32>
    %cst_17 = arith.constant dense<0.000000e+00> : vector<256xf32>
    %52 = vector.multi_reduction <add>, %51, %cst_17 [0] : vector<256x256xf32> to vector<256xf32>
    %53 = vector.shape_cast %52 : vector<256xf32> to vector<1x256xf32>
    %54 = arith.addf %49, %53 : vector<1x256xf32>
    %c0_18 = arith.constant 0 : index
    %c0_19 = arith.constant 0 : index
    %c0_20 = arith.constant 0 : index
    %55 = vector.load %arg6[%c0_18, %c0_19, %c0_20] : memref<1x1x256xf32, #tpu.memory_space<vmem>>, vector<1x1x256xf32>
    %56 = vector.shape_cast %55 : vector<1x1x256xf32> to vector<1x256xf32>
    %57 = vector.shape_cast %54 : vector<1x256xf32> to vector<1x1x256xf32>
    tpu.vector_store %arg6[%c0_18, %c0_19, %c0_20], %57 {strides = array<i32>} : memref<1x1x256xf32, #tpu.memory_space<vmem>>, vector<1x1x256xf32>,
    return
  }
  func.func @transform_0(%arg0: i32, %arg1: i32, %arg2: i32, %arg3: memref<1xi32, #tpu.memory_space<smem>>) -> (i32, i32, i32) {
    %0 = arith.index_cast %arg1 : i32 to index
    %1 = memref.load %arg3[%0] : memref<1xi32, #tpu.memory_space<smem>>
    %2 = arith.addi %1, %arg2 : i32
    %c0_i32 = arith.constant 0 : i32
    %c0_i32_0 = arith.constant 0 : i32
    return %arg0, %2, %c0_i32 : i32, i32, i32
  }
  func.func @transform_1(%arg0: i32, %arg1: i32, %arg2: i32, %arg3: memref<1xi32, #tpu.memory_space<smem>>) -> (i32, i32, i32) {
    %c0_i32 = arith.constant 0 : i32
    %c0_i32_0 = arith.constant 0 : i32
    return %arg0, %c0_i32, %arg1 : i32, i32, i32
  }
  func.func @transform_2(%arg0: i32, %arg1: i32, %arg2: i32, %arg3: memref<1xi32, #tpu.memory_space<smem>>) -> (i32, i32, i32) {
    %c0_i32 = arith.constant 0 : i32
    %c0_i32_0 = arith.constant 0 : i32
    return %arg0, %c0_i32, %arg1 : i32, i32, i32
  }
}

</mosaic_0001>

<llo_original>
// kernel: tpu_custom_call.1
$region0: #{tpu_custom_call.1}
  #allocation0 [shape = 'u32[]', space=smem, size = 0x4, offset = 0x4, fixed_abs, tag = 'smem constant byte address 0x4 - core index']
  #allocation1 [shape = 'u32[72,128]{1,0:T(1,128)}', space=vmem, size = 0x9000, scoped, tag = 'internal scratch']
  #allocation2 [shape = 's32[1]{0}', space=sflag, size = 0x4, scoped, tag = 'scoped memory for tpu_custom_call.1']
  #allocation3 [shape = 's32[1]{0:T(128)S(6)}', space=smem, size = 0x200, scoped, tag = 'prefetched SMEM operand 0']
  %s0 = inlined_call_operand.<no memory space> [shape: s32[1], index: 0, kind: input, shape index: {}]
  %s1 = inlined_call_operand.vmem [shape: f32[2,256,8], index: 1, kind: input, shape index: {}]
  %s2 = inlined_call_operand.vmem [shape: f32[2,8,256], index: 2, kind: input, shape index: {}]
  %s3 = inlined_call_operand.hbm [shape: f32[2,1,256], index: 3, kind: output, shape index: {}]
  %s4 = sld [smem:[#allocation0]]
  $region45: #{tpu_custom_call.1} parent=0
    _
  %s6 = ssub.s32 1, %s4
  %s7 = scalar_select 0, %s6, %s4
  %8 = sst [smem:[#allocation3]] %s0
  $region1: #{tpu_custom_call.1} parent=0
    #allocation4 [shape = 'u8[2048]{0}', space=vmem, size = 0x800, scoped, tag = 'output window, operand 0']
    #allocation5 [shape = 's32[2]{0}', space=sflag, size = 0x8, scoped, tag = 'scoped memory for tpu_custom_call.1']
    %9 = vsyncpa [#allocation5], 0
    %s10 = scalar_lea.sflag [#allocation5], 1
    %11 = vsyncpa %s10, 0
    loop: start=0, step=1, limit=4
    $region2: #{tpu_custom_call.1} parent=1 // loop_pre_header
      _
    $region3: #{tpu_custom_call.1} parent=1 // loop_header
      %s13 = sphi 0, %s17
      %p14 = scmp.ge.s32.totalorder %s13, 4
      %s20 = sphi 0, %s39
      %s21 = sphi 0, %s35
      %s22 = sphi 0, %s31
      %s23 = sphi 0, %s20
      %s24 = sphi 0, %s21
      %s25 = sphi 0, %s22
      %s26 = sphi 0, %s23
      %s27 = sphi 0, %s24
      %s28 = sphi 0, %s25
      %s48 = sphi 0, %s50
      %s51 = sphi 0, %s48
      %s52 = sphi 0, %s51
      %s68 = sphi 0, %s52
      %s76 = sphi 0, %s78
      %s79 = sphi 0, %s76
      %s80 = sphi 0, %s79
      %s96 = sphi 0, %s80
      %s104 = sphi 0, %s106
      %s107 = sphi 0, %s104
      %s108 = sphi 0, %s107
      %s124 = sphi 0, %s108
    $region4: #{tpu_custom_call.1} parent=1 // loop_header_branch
      %16 = sbr.rel (%p14) target = $region8
    $region5: #{tpu_custom_call.1} parent=1 // loop_body
      %s18 = ssub.s32 %s13, 1
      %s19 = ssub.s32 %s13, 2
      %s29 = sadd.s32 1, %s22
      %p30 = scmp.ge.s32.totalorder %s29, 1
      %s31 = scalar_select %p30, 0, %s29
      %s32 = sadd.s32 1, %s21
      %s33 = scalar_select %p30, %s32, %s21
      %p34 = scmp.ge.s32.totalorder %s33, 1
      %s35 = scalar_select %p34, 0, %s33
      %s36 = sadd.s32 1, %s20
      %s37 = scalar_select %p34, %s36, %s20
      %p38 = scmp.ge.s32.totalorder %s37, 2
      %s39 = scalar_select %p38, 0, %s37
      %s40 = sld [smem:[#allocation3 + %s21]]
      %s41 = sadd.s32 %s40, %s22
      %s42 = sld [smem:[#allocation3 + %s35]]
      %s43 = sadd.s32 %s42, %s31
      %s44 = ssub.s32 %s20, %s39
      %s45 = ssub.s32 %s41, %s43
      %s46 = sor.u32 %s44, %s45
      %p47 = scmp.eq.s32.totalorder %s46, 0
      %s49 = sadd.s32 %s48, 1
      %s50 = scalar_select %p47, %s48, %s49
      %p53 = pneg %p47
      %p54 = scmp.eq.s32.totalorder %s13, 1
      %p55 = por %p53, %p54
      %p56 = scmp.ne.s32.totalorder %s48, %s51
      %p57 = scmp.eq.s32.totalorder %s13, 0
      %p58 = por %p56, %p57
      %p59 = scmp.ne.s32.totalorder %s48, %s51
      %p60 = scmp.eq.s32.totalorder %s18, 1
      %p61 = por %p59, %p60
      %p62 = scmp.ne.s32.totalorder %s51, %s52
      %p63 = scmp.eq.s32.totalorder %s18, 0
      %p64 = por %p62, %p63
      %p65 = scmp.ne.s32.totalorder %s51, %s52
      %p66 = scmp.eq.s32.totalorder %s19, 1
      %p67 = por %p65, %p66
      %p69 = scmp.ne.s32.totalorder %s52, %s68
      %p70 = scmp.eq.s32.totalorder %s19, 0
      %p71 = por %p69, %p70
      %s72 = ssub.s32 %s20, %s39
      %s73 = ssub.s32 %s21, %s35
      %s74 = sor.u32 %s72, %s73
      %p75 = scmp.eq.s32.totalorder %s74, 0
      %s77 = sadd.s32 %s76, 1
      %s78 = scalar_select %p75, %s76, %s77
      %p81 = pneg %p75
      %p82 = scmp.eq.s32.totalorder %s13, 1
      %p83 = por %p81, %p82
      %p84 = scmp.ne.s32.totalorder %s76, %s79
      %p85 = scmp.eq.s32.totalorder %s13, 0
      %p86 = por %p84, %p85
      %p87 = scmp.ne.s32.totalorder %s76, %s79
      %p88 = scmp.eq.s32.totalorder %s18, 1
      %p89 = por %p87, %p88
      %p90 = scmp.ne.s32.totalorder %s79, %s80
      %p91 = scmp.eq.s32.totalorder %s18, 0
      %p92 = por %p90, %p91
      %p93 = scmp.ne.s32.totalorder %s79, %s80
      %p94 = scmp.eq.s32.totalorder %s19, 1
      %p95 = por %p93, %p94
      %p97 = scmp.ne.s32.totalorder %s80, %s96
      %p98 = scmp.eq.s32.totalorder %s19, 0
      %p99 = por %p97, %p98
      %s100 = ssub.s32 %s20, %s39
      %s101 = ssub.s32 %s21, %s35
      %s102 = sor.u32 %s100, %s101
      %p103 = scmp.eq.s32.totalorder %s102, 0
      %s105 = sadd.s32 %s104, 1
      %s106 = scalar_select %p103, %s104, %s105
      %p109 = pneg %p103
      %p110 = scmp.eq.s32.totalorder %s13, 1
      %p111 = por %p109, %p110
      %p112 = scmp.ne.s32.totalorder %s104, %s107
      %p113 = scmp.eq.s32.totalorder %s13, 0
      %p114 = por %p112, %p113
      %p115 = scmp.ne.s32.totalorder %s104, %s107
      %p116 = scmp.eq.s32.totalorder %s18, 1
      %p117 = por %p115, %p116
      %p118 = scmp.ne.s32.totalorder %s107, %s108
      %p119 = scmp.eq.s32.totalorder %s18, 0
      %p120 = por %p118, %p119
      %p121 = scmp.ne.s32.totalorder %s107, %s108
      %p122 = scmp.eq.s32.totalorder %s19, 1
      %p123 = por %p121, %p122
      %p125 = scmp.ne.s32.totalorder %s108, %s124
      %p126 = scmp.eq.s32.totalorder %s19, 0
      %p127 = por %p125, %p126
      %p128 = scmp.le.s32.totalorder 1, %s13
      %p129 = scmp.lt.s32.totalorder %s13, 3
      %p130 = pnand %p128, %p129
      %p131 = pneg %p130
      // Predicated region
      $region9: #{tpu_custom_call.1} parent=5 // pred_check
        _
      $region10: #{tpu_custom_call.1} parent=5 // pred_check_branch
        %133 = sbr.rel (%p130) target = $region12
      $region11: #{tpu_custom_call.1} parent=5 // pred_region
        %s134 = ssub.s32 %s13, 1
      $region12: #{tpu_custom_call.1} parent=5 // pred_fallthru
        _
      %p135 = scmp.lt.s32.totalorder %s13, 2
      // Predicated region
      $region13: #{tpu_custom_call.1} parent=5 // pred_check
        %p136 = pneg %p135
      $region14: #{tpu_custom_call.1} parent=5 // pred_check_branch
        %138 = sbr.rel (%p136) target = $region16
      $region15: #{tpu_custom_call.1} parent=5 // pred_region
        // Predicated region
        $region17: #{tpu_custom_call.1} parent=15 // pred_check
          %p139 = pneg %p58
        $region18: #{tpu_custom_call.1} parent=15 // pred_check_branch
          %141 = sbr.rel (%p139) target = $region20
        $region19: #{tpu_custom_call.1} parent=15 // pred_region
          %s142 = sld [smem:[#allocation3 + %s21]]
          %s143 = sadd.s32 %s142, %s22
          %s144 = smul.u32 32, %s143
          %p145 = scmp.lt.s32.totalorder %s20, 1
          %s146 = scalar_select %p145, %s20, 1
          %p147 = scmp.lt.s32.totalorder %s144, 31
          %s148 = scalar_select %p147, %s144, 31
          %s149 = smul.addr %s146, 32
          %s150 = sadd.s32 %s148, %s149
          %s151 = smul.addr %s150, 8
          %s152 = scalar_lea.vmem %s1, %s151
          %s153 = sld [smem:[#allocation3 + %s21]]
          %s154 = sadd.s32 %s153, %s22
          %s155 = smul.u32 32, %s154
        $region20: #{tpu_custom_call.1} parent=15 // pred_fallthru
          _
        // Predicated region
        $region21: #{tpu_custom_call.1} parent=15 // pred_check
          %p156 = pneg %p86
        $region22: #{tpu_custom_call.1} parent=15 // pred_check_branch
          %158 = sbr.rel (%p156) target = $region24
        $region23: #{tpu_custom_call.1} parent=15 // pred_region
          %s159 = smul.u32 2, %s21
          %p160 = scmp.lt.s32.totalorder %s20, 1
          %s161 = scalar_select %p160, %s20, 1
          %p162 = scmp.lt.s32.totalorder %s159, 1
          %s163 = scalar_select %p162, %s159, 1
          %s164 = smul.addr %s161, 2
          %s165 = sadd.s32 %s163, %s164
          %s166 = smul.addr %s165, 8
          %s167 = scalar_lea.vmem %s2, %s166
          %s168 = smul.u32 2, %s21
        $region24: #{tpu_custom_call.1} parent=15 // pred_fallthru
          _
      $region16: #{tpu_custom_call.1} parent=5 // pred_fallthru
        _
      %p169 = scmp.le.s32.totalorder 1, %s13
      %p170 = scmp.lt.s32.totalorder %s13, 3
      %p171 = pnand %p169, %p170
      %p172 = pneg %p171
      // Predicated region
      $region25: #{tpu_custom_call.1} parent=5 // pred_check
        _
      $region26: #{tpu_custom_call.1} parent=5 // pred_check_branch
        %174 = sbr.rel (%p171) target = $region28
      $region27: #{tpu_custom_call.1} parent=5 // pred_region
        %s175 = ssub.s32 %s13, 1
        %s176 = sld [smem:[#allocation3 + %s24]]
        %s177 = sadd.s32 %s176, %s25
        %s178 = smul.u32 32, %s177
        %p179 = scmp.lt.s32.totalorder %s23, 1
        %s180 = scalar_select %p179, %s23, 1
        %p181 = scmp.lt.s32.totalorder %s178, 31
        %s182 = scalar_select %p181, %s178, 31
        %s183 = smul.addr %s180, 32
        %s184 = sadd.s32 %s182, %s183
        %s185 = smul.addr %s184, 8
        %s186 = scalar_lea.vmem %s1, %s185
        %p187 = pneg %p64
        %p188 = pneg %p61
        %s189 = smul.u32 2, %s24
        %p190 = scmp.lt.s32.totalorder %s23, 1
        %s191 = scalar_select %p190, %s23, 1
        %p192 = scmp.lt.s32.totalorder %s189, 1
        %s193 = scalar_select %p192, %s189, 1
        %s194 = smul.addr %s191, 2
        %s195 = sadd.s32 %s193, %s194
        %s196 = smul.addr %s195, 8
        %s197 = scalar_lea.vmem %s2, %s196
        %p198 = pneg %p92
        %p199 = pneg %p89
        %p200 = pneg %p120
        %p201 = pneg %p117
        %s202 = sand.u32 %s107, 1
        %s203 = scalar_lea.sflag [#allocation5], %s202
        %s204 = sand.u32 %s107, 1
        %s205 = smul.addr %s204, 2
        %s206 = scalar_lea.vmem [#allocation4], %s205
        %s207 = sld [smem:[#allocation3 + %s24]]
        %s208 = sadd.s32 %s207, %s25
        %s209 = smul.u32 32, %s208
        %p210 = scmp.lt.s32.totalorder %s23, 1
        %s211 = scalar_select %p210, %s23, 1
        %p212 = scmp.lt.s32.totalorder %s209, 31
        %s213 = scalar_select %p212, %s209, 31
        %s214 = smul.addr %s211, 32
        %s215 = sadd.s32 %s213, %s214
        %s216 = smul.addr %s215, 8
        %s217 = scalar_lea.vmem %s1, %s216
        %s218 = sld [smem:[#allocation3 + %s24]]
        %s219 = sadd.s32 %s218, %s25
        %s220 = smul.u32 32, %s219
        %s221 = smul.u32 2, %s24
        %p222 = scmp.lt.s32.totalorder %s23, 1
        %s223 = scalar_select %p222, %s23, 1
        %p224 = scmp.lt.s32.totalorder %s221, 1
        %s225 = scalar_select %p224, %s221, 1
        %s226 = smul.addr %s223, 2
        %s227 = sadd.s32 %s225, %s226
        %s228 = smul.addr %s227, 8
        %s229 = scalar_lea.vmem %s2, %s228
        %s230 = smul.u32 2, %s24
        %s231 = smul.u32 2, %s24
        %p232 = scmp.eq.s32.totalorder %s25, 0
        // Predicated region
        $region29: #{tpu_custom_call.1} parent=27 // pred_check
          %p233 = pneg %p232
        $region30: #{tpu_custom_call.1} parent=27 // pred_check_branch
          %235 = sbr.rel (%p233) target = $region32
        $region31: #{tpu_custom_call.1} parent=27 // pred_region
          %v236 = vlaneseq
          %vm237 = vcmp.ge.s32.totalorder %v236, 0
          %vm238 = vcmp.lt.s32.totalorder %v236, 256
          %vm239 = vmand %vm237, %vm238
          %240 = vst.msk [vmem:[%s206] sm:$0x3] %vm239, 0.0
        $region32: #{tpu_custom_call.1} parent=27 // pred_fallthru
          _
        %v241 = vld [vmem:[%s217] sm:$0xff]
        %v242 = vld [vmem:[%s217 + $0x8] sm:$0xff]
        %v243 = vld [vmem:[%s217 + $0x10] sm:$0xff]
        %v244 = vld [vmem:[%s217 + $0x18] sm:$0xff]
        %v245 = vld [vmem:[%s217 + $0x20] sm:$0xff]
        %v246 = vld [vmem:[%s217 + $0x28] sm:$0xff]
        %v247 = vld [vmem:[%s217 + $0x30] sm:$0xff]
        %v248 = vld [vmem:[%s217 + $0x38] sm:$0xff]
        %v249 = vld [vmem:[%s217 + $0x40] sm:$0xff]
        %v250 = vld [vmem:[%s217 + $0x48] sm:$0xff]
        %v251 = vld [vmem:[%s217 + $0x50] sm:$0xff]
        %v252 = vld [vmem:[%s217 + $0x58] sm:$0xff]
        %v253 = vld [vmem:[%s217 + $0x60] sm:$0xff]
        %v254 = vld [vmem:[%s217 + $0x68] sm:$0xff]
        %v255 = vld [vmem:[%s217 + $0x70] sm:$0xff]
        %v256 = vld [vmem:[%s217 + $0x78] sm:$0xff]
        %v257 = vld [vmem:[%s217 + $0x80] sm:$0xff]
        %v258 = vld [vmem:[%s217 + $0x88] sm:$0xff]
        %v259 = vld [vmem:[%s217 + $0x90] sm:$0xff]
        %v260 = vld [vmem:[%s217 + $0x98] sm:$0xff]
        %v261 = vld [vmem:[%s217 + $0xa0] sm:$0xff]
        %v262 = vld [vmem:[%s217 + $0xa8] sm:$0xff]
        %v263 = vld [vmem:[%s217 + $0xb0] sm:$0xff]
        %v264 = vld [vmem:[%s217 + $0xb8] sm:$0xff]
        %v265 = vld [vmem:[%s217 + $0xc0] sm:$0xff]
        %v266 = vld [vmem:[%s217 + $0xc8] sm:$0xff]
        %v267 = vld [vmem:[%s217 + $0xd0] sm:$0xff]
        %v268 = vld [vmem:[%s217 + $0xd8] sm:$0xff]
        %v269 = vld [vmem:[%s217 + $0xe0] sm:$0xff]
        %v270 = vld [vmem:[%s217 + $0xe8] sm:$0xff]
        %v271 = vld [vmem:[%s217 + $0xf0] sm:$0xff]
        %v272 = vld [vmem:[%s217 + $0xf8] sm:$0xff]
        %v273 = vld [vmem:[%s229] sm:$0xff]
        %v274 = vld [vmem:[%s229 + $0x8] sm:$0xff]
        %276 = vset.pattern.permute.xlu0 3
        %277 = vperm.xlu0 %276, %v241
        %v278 = vpop.permute.xlu0 %277
        %281 = vset.pattern.permute.xlu0 3
        %282 = vperm.xlu0 %281, %v242
        %v283 = vpop.permute.xlu0 %282
        %286 = vset.pattern.permute.xlu0 3
        %287 = vperm.xlu0 %286, %v243
        %v288 = vpop.permute.xlu0 %287
        %291 = vset.pattern.permute.xlu0 3
        %292 = vperm.xlu0 %291, %v244
        %v293 = vpop.permute.xlu0 %292
        %296 = vset.pattern.permute.xlu0 3
        %297 = vperm.xlu0 %296, %v245
        %v298 = vpop.permute.xlu0 %297
        %301 = vset.pattern.permute.xlu0 3
        %302 = vperm.xlu0 %301, %v246
        %v303 = vpop.permute.xlu0 %302
        %306 = vset.pattern.permute.xlu0 3
        %307 = vperm.xlu0 %306, %v247
        %v308 = vpop.permute.xlu0 %307
        %311 = vset.pattern.permute.xlu0 3
        %312 = vperm.xlu0 %311, %v248
        %v313 = vpop.permute.xlu0 %312
        %316 = vset.pattern.permute.xlu0 3
        %317 = vperm.xlu0 %316, %v249
        %v318 = vpop.permute.xlu0 %317
        %321 = vset.pattern.permute.xlu0 3
        %322 = vperm.xlu0 %321, %v250
        %v323 = vpop.permute.xlu0 %322
        %326 = vset.pattern.permute.xlu0 3
        %327 = vperm.xlu0 %326, %v251
        %v328 = vpop.permute.xlu0 %327
        %331 = vset.pattern.permute.xlu0 3
        %332 = vperm.xlu0 %331, %v252
        %v333 = vpop.permute.xlu0 %332
        %336 = vset.pattern.permute.xlu0 3
        %337 = vperm.xlu0 %336, %v253
        %v338 = vpop.permute.xlu0 %337
        %341 = vset.pattern.permute.xlu0 3
        %342 = vperm.xlu0 %341, %v254
        %v343 = vpop.permute.xlu0 %342
        %346 = vset.pattern.permute.xlu0 3
        %347 = vperm.xlu0 %346, %v255
        %v348 = vpop.permute.xlu0 %347
        %351 = vset.pattern.permute.xlu0 3
        %352 = vperm.xlu0 %351, %v256
        %v353 = vpop.permute.xlu0 %352
        %356 = vset.pattern.permute.xlu0 3
        %357 = vperm.xlu0 %356, %v257
        %v358 = vpop.permute.xlu0 %357
        %361 = vset.pattern.permute.xlu0 3
        %362 = vperm.xlu0 %361, %v258
        %v363 = vpop.permute.xlu0 %362
        %366 = vset.pattern.permute.xlu0 3
        %367 = vperm.xlu0 %366, %v259
        %v368 = vpop.permute.xlu0 %367
        %371 = vset.pattern.permute.xlu0 3
        %372 = vperm.xlu0 %371, %v260
        %v373 = vpop.permute.xlu0 %372
        %376 = vset.pattern.permute.xlu0 3
        %377 = vperm.xlu0 %376, %v261
        %v378 = vpop.permute.xlu0 %377
        %381 = vset.pattern.permute.xlu0 3
        %382 = vperm.xlu0 %381, %v262
        %v383 = vpop.permute.xlu0 %382
        %386 = vset.pattern.permute.xlu0 3
        %387 = vperm.xlu0 %386, %v263
        %v388 = vpop.permute.xlu0 %387
        %391 = vset.pattern.permute.xlu0 3
        %392 = vperm.xlu0 %391, %v264
        %v393 = vpop.permute.xlu0 %392
        %396 = vset.pattern.permute.xlu0 3
        %397 = vperm.xlu0 %396, %v265
        %v398 = vpop.permute.xlu0 %397
        %401 = vset.pattern.permute.xlu0 3
        %402 = vperm.xlu0 %401, %v266
        %v403 = vpop.permute.xlu0 %402
        %406 = vset.pattern.permute.xlu0 3
        %407 = vperm.xlu0 %406, %v267
        %v408 = vpop.permute.xlu0 %407
        %411 = vset.pattern.permute.xlu0 3
        %412 = vperm.xlu0 %411, %v268
        %v413 = vpop.permute.xlu0 %412
        %416 = vset.pattern.permute.xlu0 3
        %417 = vperm.xlu0 %416, %v269
        %v418 = vpop.permute.xlu0 %417
        %421 = vset.pattern.permute.xlu0 3
        %422 = vperm.xlu0 %421, %v270
        %v423 = vpop.permute.xlu0 %422
        %426 = vset.pattern.permute.xlu0 3
        %427 = vperm.xlu0 %426, %v271
        %v428 = vpop.permute.xlu0 %427
        %431 = vset.pattern.permute.xlu0 3
        %432 = vperm.xlu0 %431, %v272
        %v433 = vpop.permute.xlu0 %432
        %v435 = vperm.slane %v273, 3
        %v436 = vperm.slane %v274, 3
        %v437 = vsub.f32 %v278, %v435
        %v438 = vsub.f32 %v278, %v436
        %v439 = vsub.f32 %v283, %v435
        %v440 = vsub.f32 %v283, %v436
        %v441 = vsub.f32 %v288, %v435
        %v442 = vsub.f32 %v288, %v436
        %v443 = vsub.f32 %v293, %v435
        %v444 = vsub.f32 %v293, %v436
        %v445 = vsub.f32 %v298, %v435
        %v446 = vsub.f32 %v298, %v436
        %v447 = vsub.f32 %v303, %v435
        %v448 = vsub.f32 %v303, %v436
        %v449 = vsub.f32 %v308, %v435
        %v450 = vsub.f32 %v308, %v436
        %v451 = vsub.f32 %v313, %v435
        %v452 = vsub.f32 %v313, %v436
        %v453 = vsub.f32 %v318, %v435
        %v454 = vsub.f32 %v318, %v436
        %v455 = vsub.f32 %v323, %v435
        %v456 = vsub.f32 %v323, %v436
        %v457 = vsub.f32 %v328, %v435
        %v458 = vsub.f32 %v328, %v436
        %v459 = vsub.f32 %v333, %v435
        %v460 = vsub.f32 %v333, %v436
        %v461 = vsub.f32 %v338, %v435
        %v462 = vsub.f32 %v338, %v436
        %v463 = vsub.f32 %v343, %v435
        %v464 = vsub.f32 %v343, %v436
        %v465 = vsub.f32 %v348, %v435
        %v466 = vsub.f32 %v348, %v436
        %v467 = vsub.f32 %v353, %v435
        %v468 = vsub.f32 %v353, %v436
        %v469 = vsub.f32 %v358, %v435
        %v470 = vsub.f32 %v358, %v436
        %v471 = vsub.f32 %v363, %v435
        %v472 = vsub.f32 %v363, %v436
        %v473 = vsub.f32 %v368, %v435
        %v474 = vsub.f32 %v368, %v436
        %v475 = vsub.f32 %v373, %v435
        %v476 = vsub.f32 %v373, %v436
        %v477 = vsub.f32 %v378, %v435
        %v478 = vsub.f32 %v378, %v436
        %v479 = vsub.f32 %v383, %v435
        %v480 = vsub.f32 %v383, %v436
        %v481 = vsub.f32 %v388, %v435
        %v482 = vsub.f32 %v388, %v436
        %v483 = vsub.f32 %v393, %v435
        %v484 = vsub.f32 %v393, %v436
        %v485 = vsub.f32 %v398, %v435
        %v486 = vsub.f32 %v398, %v436
        %v487 = vsub.f32 %v403, %v435
        %v488 = vsub.f32 %v403, %v436
        %v489 = vsub.f32 %v408, %v435
        %v490 = vsub.f32 %v408, %v436
        %v491 = vsub.f32 %v413, %v435
        %v492 = vsub.f32 %v413, %v436
        %v493 = vsub.f32 %v418, %v435
        %v494 = vsub.f32 %v418, %v436
        %v495 = vsub.f32 %v423, %v435
        %v496 = vsub.f32 %v423, %v436
        %v497 = vsub.f32 %v428, %v435
        %v498 = vsub.f32 %v428, %v436
        %v499 = vsub.f32 %v433, %v435
        %v500 = vsub.f32 %v433, %v436
        %501 = vset.pattern.permute.xlu0 4
        %502 = vperm.xlu0 %501, %v241
        %v503 = vpop.permute.xlu0 %502
        %505 = vset.pattern.permute.xlu0 4
        %506 = vperm.xlu0 %505, %v242
        %v507 = vpop.permute.xlu0 %506
        %509 = vset.pattern.permute.xlu0 4
        %510 = vperm.xlu0 %509, %v243
        %v511 = vpop.permute.xlu0 %510
        %513 = vset.pattern.permute.xlu0 4
        %514 = vperm.xlu0 %513, %v244
        %v515 = vpop.permute.xlu0 %514
        %517 = vset.pattern.permute.xlu0 4
        %518 = vperm.xlu0 %517, %v245
        %v519 = vpop.permute.xlu0 %518
        %521 = vset.pattern.permute.xlu0 4
        %522 = vperm.xlu0 %521, %v246
        %v523 = vpop.permute.xlu0 %522
        %525 = vset.pattern.permute.xlu0 4
        %526 = vperm.xlu0 %525, %v247
        %v527 = vpop.permute.xlu0 %526
        %529 = vset.pattern.permute.xlu0 4
        %530 = vperm.xlu0 %529, %v248
        %v531 = vpop.permute.xlu0 %530
        %533 = vset.pattern.permute.xlu0 4
        %534 = vperm.xlu0 %533, %v249
        %v535 = vpop.permute.xlu0 %534
        %537 = vset.pattern.permute.xlu0 4
        %538 = vperm.xlu0 %537, %v250
        %v539 = vpop.permute.xlu0 %538
        %541 = vset.pattern.permute.xlu0 4
        %542 = vperm.xlu0 %541, %v251
        %v543 = vpop.permute.xlu0 %542
        %545 = vset.pattern.permute.xlu0 4
        %546 = vperm.xlu0 %545, %v252
        %v547 = vpop.permute.xlu0 %546
        %549 = vset.pattern.permute.xlu0 4
        %550 = vperm.xlu0 %549, %v253
        %v551 = vpop.permute.xlu0 %550
        %553 = vset.pattern.permute.xlu0 4
        %554 = vperm.xlu0 %553, %v254
        %v555 = vpop.permute.xlu0 %554
        %557 = vset.pattern.permute.xlu0 4
        %558 = vperm.xlu0 %557, %v255
        %v559 = vpop.permute.xlu0 %558
        %561 = vset.pattern.permute.xlu0 4
        %562 = vperm.xlu0 %561, %v256
        %v563 = vpop.permute.xlu0 %562
        %565 = vset.pattern.permute.xlu0 4
        %566 = vperm.xlu0 %565, %v257
        %v567 = vpop.permute.xlu0 %566
        %569 = vset.pattern.permute.xlu0 4
        %570 = vperm.xlu0 %569, %v258
        %v571 = vpop.permute.xlu0 %570
        %573 = vset.pattern.permute.xlu0 4
        %574 = vperm.xlu0 %573, %v259
        %v575 = vpop.permute.xlu0 %574
        %577 = vset.pattern.permute.xlu0 4
        %578 = vperm.xlu0 %577, %v260
        %v579 = vpop.permute.xlu0 %578
        %581 = vset.pattern.permute.xlu0 4
        %582 = vperm.xlu0 %581, %v261
        %v583 = vpop.permute.xlu0 %582
        %585 = vset.pattern.permute.xlu0 4
        %586 = vperm.xlu0 %585, %v262
        %v587 = vpop.permute.xlu0 %586
        %589 = vset.pattern.permute.xlu0 4
        %590 = vperm.xlu0 %589, %v263
        %v591 = vpop.permute.xlu0 %590
        %593 = vset.pattern.permute.xlu0 4
        %594 = vperm.xlu0 %593, %v264
        %v595 = vpop.permute.xlu0 %594
        %597 = vset.pattern.permute.xlu0 4
        %598 = vperm.xlu0 %597, %v265
        %v599 = vpop.permute.xlu0 %598
        %601 = vset.pattern.permute.xlu0 4
        %602 = vperm.xlu0 %601, %v266
        %v603 = vpop.permute.xlu0 %602
        %605 = vset.pattern.permute.xlu0 4
        %606 = vperm.xlu0 %605, %v267
        %v607 = vpop.permute.xlu0 %606
        %609 = vset.pattern.permute.xlu0 4
        %610 = vperm.xlu0 %609, %v268
        %v611 = vpop.permute.xlu0 %610
        %613 = vset.pattern.permute.xlu0 4
        %614 = vperm.xlu0 %613, %v269
        %v615 = vpop.permute.xlu0 %614
        %617 = vset.pattern.permute.xlu0 4
        %618 = vperm.xlu0 %617, %v270
        %v619 = vpop.permute.xlu0 %618
        %621 = vset.pattern.permute.xlu0 4
        %622 = vperm.xlu0 %621, %v271
        %v623 = vpop.permute.xlu0 %622
        %625 = vset.pattern.permute.xlu0 4
        %626 = vperm.xlu0 %625, %v272
        %v627 = vpop.permute.xlu0 %626
        %v629 = vperm.slane %v273, 4
        %v630 = vperm.slane %v274, 4
        %v631 = vsub.f32 %v503, %v629
        %v632 = vsub.f32 %v503, %v630
        %v633 = vsub.f32 %v507, %v629
        %v634 = vsub.f32 %v507, %v630
        %v635 = vsub.f32 %v511, %v629
        %v636 = vsub.f32 %v511, %v630
        %v637 = vsub.f32 %v515, %v629
        %v638 = vsub.f32 %v515, %v630
        %v639 = vsub.f32 %v519, %v629
        %v640 = vsub.f32 %v519, %v630
        %v641 = vsub.f32 %v523, %v629
        %v642 = vsub.f32 %v523, %v630
        %v643 = vsub.f32 %v527, %v629
        %v644 = vsub.f32 %v527, %v630
        %v645 = vsub.f32 %v531, %v629
        %v646 = vsub.f32 %v531, %v630
        %v647 = vsub.f32 %v535, %v629
        %v648 = vsub.f32 %v535, %v630
        %v649 = vsub.f32 %v539, %v629
        %v650 = vsub.f32 %v539, %v630
        %v651 = vsub.f32 %v543, %v629
        %v652 = vsub.f32 %v543, %v630
        %v653 = vsub.f32 %v547, %v629
        %v654 = vsub.f32 %v547, %v630
        %v655 = vsub.f32 %v551, %v629
        %v656 = vsub.f32 %v551, %v630
        %v657 = vsub.f32 %v555, %v629
        %v658 = vsub.f32 %v555, %v630
        %v659 = vsub.f32 %v559, %v629
        %v660 = vsub.f32 %v559, %v630
        %v661 = vsub.f32 %v563, %v629
        %v662 = vsub.f32 %v563, %v630
        %v663 = vsub.f32 %v567, %v629
        %v664 = vsub.f32 %v567, %v630
        %v665 = vsub.f32 %v571, %v629
        %v666 = vsub.f32 %v571, %v630
        %v667 = vsub.f32 %v575, %v629
        %v668 = vsub.f32 %v575, %v630
        %v669 = vsub.f32 %v579, %v629
        %v670 = vsub.f32 %v579, %v630
        %v671 = vsub.f32 %v583, %v629
        %v672 = vsub.f32 %v583, %v630
        %v673 = vsub.f32 %v587, %v629
        %v674 = vsub.f32 %v587, %v630
        %v675 = vsub.f32 %v591, %v629
        %v676 = vsub.f32 %v591, %v630
        %v677 = vsub.f32 %v595, %v629
        %v678 = vsub.f32 %v595, %v630
        %v679 = vsub.f32 %v599, %v629
        %v680 = vsub.f32 %v599, %v630
        %v681 = vsub.f32 %v603, %v629
        %v682 = vsub.f32 %v603, %v630
        %v683 = vsub.f32 %v607, %v629
        %v684 = vsub.f32 %v607, %v630
        %v685 = vsub.f32 %v611, %v629
        %v686 = vsub.f32 %v611, %v630
        %v687 = vsub.f32 %v615, %v629
        %v688 = vsub.f32 %v615, %v630
        %v689 = vsub.f32 %v619, %v629
        %v690 = vsub.f32 %v619, %v630
        %v691 = vsub.f32 %v623, %v629
        %v692 = vsub.f32 %v623, %v630
        %v693 = vsub.f32 %v627, %v629
        %v694 = vsub.f32 %v627, %v630
        %v695 = vand.u32 2147483647, %v437
        %v696 = vand.u32 2147483647, %v438
        %v697 = vand.u32 2147483647, %v439
        %v698 = vand.u32 2147483647, %v440
        %v699 = vand.u32 2147483647, %v441
        %v700 = vand.u32 2147483647, %v442
        %v701 = vand.u32 2147483647, %v443
        %v702 = vand.u32 2147483647, %v444
        %v703 = vand.u32 2147483647, %v445
        %v704 = vand.u32 2147483647, %v446
        %v705 = vand.u32 2147483647, %v447
        %v706 = vand.u32 2147483647, %v448
        %v707 = vand.u32 2147483647, %v449
        %v708 = vand.u32 2147483647, %v450
        %v709 = vand.u32 2147483647, %v451
        %v710 = vand.u32 2147483647, %v452
        %v711 = vand.u32 2147483647, %v453
        %v712 = vand.u32 2147483647, %v454
        %v713 = vand.u32 2147483647, %v455
        %v714 = vand.u32 2147483647, %v456
        %v715 = vand.u32 2147483647, %v457
        %v716 = vand.u32 2147483647, %v458
        %v717 = vand.u32 2147483647, %v459
        %v718 = vand.u32 2147483647, %v460
        %v719 = vand.u32 2147483647, %v461
        %v720 = vand.u32 2147483647, %v462
        %v721 = vand.u32 2147483647, %v463
        %v722 = vand.u32 2147483647, %v464
        %v723 = vand.u32 2147483647, %v465
        %v724 = vand.u32 2147483647, %v466
        %v725 = vand.u32 2147483647, %v467
        %v726 = vand.u32 2147483647, %v468
        %v727 = vand.u32 2147483647, %v469
        %v728 = vand.u32 2147483647, %v470
        %v729 = vand.u32 2147483647, %v471
        %v730 = vand.u32 2147483647, %v472
        %v731 = vand.u32 2147483647, %v473
        %v732 = vand.u32 2147483647, %v474
        %v733 = vand.u32 2147483647, %v475
        %v734 = vand.u32 2147483647, %v476
        %v735 = vand.u32 2147483647, %v477
        %v736 = vand.u32 2147483647, %v478
        %v737 = vand.u32 2147483647, %v479
        %v738 = vand.u32 2147483647, %v480
        %v739 = vand.u32 2147483647, %v481
        %v740 = vand.u32 2147483647, %v482
        %v741 = vand.u32 2147483647, %v483
        %v742 = vand.u32 2147483647, %v484
        %v743 = vand.u32 2147483647, %v485
        %v744 = vand.u32 2147483647, %v486
        %v745 = vand.u32 2147483647, %v487
        %v746 = vand.u32 2147483647, %v488
        %v747 = vand.u32 2147483647, %v489
        %v748 = vand.u32 2147483647, %v490
        %v749 = vand.u32 2147483647, %v491
        %v750 = vand.u32 2147483647, %v492
        %v751 = vand.u32 2147483647, %v493
        %v752 = vand.u32 2147483647, %v494
        %v753 = vand.u32 2147483647, %v495
        %v754 = vand.u32 2147483647, %v496
        %v755 = vand.u32 2147483647, %v497
        %v756 = vand.u32 2147483647, %v498
        %v757 = vand.u32 2147483647, %v499
        %v758 = vand.u32 2147483647, %v500
        %vm759 = vcmp.le.f32.partialorder %v695, 24.0
        %vm760 = vcmp.le.f32.partialorder %v696, 24.0
        %vm761 = vcmp.le.f32.partialorder %v697, 24.0
        %vm762 = vcmp.le.f32.partialorder %v698, 24.0
        %vm763 = vcmp.le.f32.partialorder %v699, 24.0
        %vm764 = vcmp.le.f32.partialorder %v700, 24.0
        %vm765 = vcmp.le.f32.partialorder %v701, 24.0
        %vm766 = vcmp.le.f32.partialorder %v702, 24.0
        %vm767 = vcmp.le.f32.partialorder %v703, 24.0
        %vm768 = vcmp.le.f32.partialorder %v704, 24.0
        %vm769 = vcmp.le.f32.partialorder %v705, 24.0
        %vm770 = vcmp.le.f32.partialorder %v706, 24.0
        %vm771 = vcmp.le.f32.partialorder %v707, 24.0
        %vm772 = vcmp.le.f32.partialorder %v708, 24.0
        %vm773 = vcmp.le.f32.partialorder %v709, 24.0
        %vm774 = vcmp.le.f32.partialorder %v710, 24.0
        %vm775 = vcmp.le.f32.partialorder %v711, 24.0
        %vm776 = vcmp.le.f32.partialorder %v712, 24.0
        %vm777 = vcmp.le.f32.partialorder %v713, 24.0
        %vm778 = vcmp.le.f32.partialorder %v714, 24.0
        %vm779 = vcmp.le.f32.partialorder %v715, 24.0
        %vm780 = vcmp.le.f32.partialorder %v716, 24.0
        %vm781 = vcmp.le.f32.partialorder %v717, 24.0
        %vm782 = vcmp.le.f32.partialorder %v718, 24.0
        %vm783 = vcmp.le.f32.partialorder %v719, 24.0
        %vm784 = vcmp.le.f32.partialorder %v720, 24.0
        %vm785 = vcmp.le.f32.partialorder %v721, 24.0
        %vm786 = vcmp.le.f32.partialorder %v722, 24.0
        %vm787 = vcmp.le.f32.partialorder %v723, 24.0
        %vm788 = vcmp.le.f32.partialorder %v724, 24.0
        %vm789 = vcmp.le.f32.partialorder %v725, 24.0
        %vm790 = vcmp.le.f32.partialorder %v726, 24.0
        %vm791 = vcmp.le.f32.partialorder %v727, 24.0
        %vm792 = vcmp.le.f32.partialorder %v728, 24.0
        %vm793 = vcmp.le.f32.partialorder %v729, 24.0
        %vm794 = vcmp.le.f32.partialorder %v730, 24.0
        %vm795 = vcmp.le.f32.partialorder %v731, 24.0
        %vm796 = vcmp.le.f32.partialorder %v732, 24.0
        %vm797 = vcmp.le.f32.partialorder %v733, 24.0
        %vm798 = vcmp.le.f32.partialorder %v734, 24.0
        %vm799 = vcmp.le.f32.partialorder %v735, 24.0
        %vm800 = vcmp.le.f32.partialorder %v736, 24.0
        %vm801 = vcmp.le.f32.partialorder %v737, 24.0
        %vm802 = vcmp.le.f32.partialorder %v738, 24.0
        %vm803 = vcmp.le.f32.partialorder %v739, 24.0
        %vm804 = vcmp.le.f32.partialorder %v740, 24.0
        %vm805 = vcmp.le.f32.partialorder %v741, 24.0
        %vm806 = vcmp.le.f32.partialorder %v742, 24.0
        %vm807 = vcmp.le.f32.partialorder %v743, 24.0
        %vm808 = vcmp.le.f32.partialorder %v744, 24.0
        %vm809 = vcmp.le.f32.partialorder %v745, 24.0
        %vm810 = vcmp.le.f32.partialorder %v746, 24.0
        %vm811 = vcmp.le.f32.partialorder %v747, 24.0
        %vm812 = vcmp.le.f32.partialorder %v748, 24.0
        %vm813 = vcmp.le.f32.partialorder %v749, 24.0
        %vm814 = vcmp.le.f32.partialorder %v750, 24.0
        %vm815 = vcmp.le.f32.partialorder %v751, 24.0
        %vm816 = vcmp.le.f32.partialorder %v752, 24.0
        %vm817 = vcmp.le.f32.partialorder %v753, 24.0
        %vm818 = vcmp.le.f32.partialorder %v754, 24.0
        %vm819 = vcmp.le.f32.partialorder %v755, 24.0
        %vm820 = vcmp.le.f32.partialorder %v756, 24.0
        %vm821 = vcmp.le.f32.partialorder %v757, 24.0
        %vm822 = vcmp.le.f32.partialorder %v758, 24.0
        %v823 = vand.u32 2147483647, %v631
        %v824 = vand.u32 2147483647, %v632
        %v825 = vand.u32 2147483647, %v633
        %v826 = vand.u32 2147483647, %v634
        %v827 = vand.u32 2147483647, %v635
        %v828 = vand.u32 2147483647, %v636
        %v829 = vand.u32 2147483647, %v637
        %v830 = vand.u32 2147483647, %v638
        %v831 = vand.u32 2147483647, %v639
        %v832 = vand.u32 2147483647, %v640
        %v833 = vand.u32 2147483647, %v641
        %v834 = vand.u32 2147483647, %v642
        %v835 = vand.u32 2147483647, %v643
        %v836 = vand.u32 2147483647, %v644
        %v837 = vand.u32 2147483647, %v645
        %v838 = vand.u32 2147483647, %v646
        %v839 = vand.u32 2147483647, %v647
        %v840 = vand.u32 2147483647, %v648
        %v841 = vand.u32 2147483647, %v649
        %v842 = vand.u32 2147483647, %v650
        %v843 = vand.u32 2147483647, %v651
        %v844 = vand.u32 2147483647, %v652
        %v845 = vand.u32 2147483647, %v653
        %v846 = vand.u32 2147483647, %v654
        %v847 = vand.u32 2147483647, %v655
        %v848 = vand.u32 2147483647, %v656
        %v849 = vand.u32 2147483647, %v657
        %v850 = vand.u32 2147483647, %v658
        %v851 = vand.u32 2147483647, %v659
        %v852 = vand.u32 2147483647, %v660
        %v853 = vand.u32 2147483647, %v661
        %v854 = vand.u32 2147483647, %v662
        %v855 = vand.u32 2147483647, %v663
        %v856 = vand.u32 2147483647, %v664
        %v857 = vand.u32 2147483647, %v665
        %v858 = vand.u32 2147483647, %v666
        %v859 = vand.u32 2147483647, %v667
        %v860 = vand.u32 2147483647, %v668
        %v861 = vand.u32 2147483647, %v669
        %v862 = vand.u32 2147483647, %v670
        %v863 = vand.u32 2147483647, %v671
        %v864 = vand.u32 2147483647, %v672
        %v865 = vand.u32 2147483647, %v673
        %v866 = vand.u32 2147483647, %v674
        %v867 = vand.u32 2147483647, %v675
        %v868 = vand.u32 2147483647, %v676
        %v869 = vand.u32 2147483647, %v677
        %v870 = vand.u32 2147483647, %v678
        %v871 = vand.u32 2147483647, %v679
        %v872 = vand.u32 2147483647, %v680
        %v873 = vand.u32 2147483647, %v681
        %v874 = vand.u32 2147483647, %v682
        %v875 = vand.u32 2147483647, %v683
        %v876 = vand.u32 2147483647, %v684
        %v877 = vand.u32 2147483647, %v685
        %v878 = vand.u32 2147483647, %v686
        %v879 = vand.u32 2147483647, %v687
        %v880 = vand.u32 2147483647, %v688
        %v881 = vand.u32 2147483647, %v689
        %v882 = vand.u32 2147483647, %v690
        %v883 = vand.u32 2147483647, %v691
        %v884 = vand.u32 2147483647, %v692
        %v885 = vand.u32 2147483647, %v693
        %v886 = vand.u32 2147483647, %v694
        %vm887 = vcmp.le.f32.partialorder %v823, 24.0
        %vm888 = vcmp.le.f32.partialorder %v824, 24.0
        %vm889 = vcmp.le.f32.partialorder %v825, 24.0
        %vm890 = vcmp.le.f32.partialorder %v826, 24.0
        %vm891 = vcmp.le.f32.partialorder %v827, 24.0
        %vm892 = vcmp.le.f32.partialorder %v828, 24.0
        %vm893 = vcmp.le.f32.partialorder %v829, 24.0
        %vm894 = vcmp.le.f32.partialorder %v830, 24.0
        %vm895 = vcmp.le.f32.partialorder %v831, 24.0
        %vm896 = vcmp.le.f32.partialorder %v832, 24.0
        %vm897 = vcmp.le.f32.partialorder %v833, 24.0
        %vm898 = vcmp.le.f32.partialorder %v834, 24.0
        %vm899 = vcmp.le.f32.partialorder %v835, 24.0
        %vm900 = vcmp.le.f32.partialorder %v836, 24.0
        %vm901 = vcmp.le.f32.partialorder %v837, 24.0
        %vm902 = vcmp.le.f32.partialorder %v838, 24.0
        %vm903 = vcmp.le.f32.partialorder %v839, 24.0
        %vm904 = vcmp.le.f32.partialorder %v840, 24.0
        %vm905 = vcmp.le.f32.partialorder %v841, 24.0
        %vm906 = vcmp.le.f32.partialorder %v842, 24.0
        %vm907 = vcmp.le.f32.partialorder %v843, 24.0
        %vm908 = vcmp.le.f32.partialorder %v844, 24.0
        %vm909 = vcmp.le.f32.partialorder %v845, 24.0
        %vm910 = vcmp.le.f32.partialorder %v846, 24.0
        %vm911 = vcmp.le.f32.partialorder %v847, 24.0
        %vm912 = vcmp.le.f32.partialorder %v848, 24.0
        %vm913 = vcmp.le.f32.partialorder %v849, 24.0
        %vm914 = vcmp.le.f32.partialorder %v850, 24.0
        %vm915 = vcmp.le.f32.partialorder %v851, 24.0
        %vm916 = vcmp.le.f32.partialorder %v852, 24.0
        %vm917 = vcmp.le.f32.partialorder %v853, 24.0
        %vm918 = vcmp.le.f32.partialorder %v854, 24.0
        %vm919 = vcmp.le.f32.partialorder %v855, 24.0
        %vm920 = vcmp.le.f32.partialorder %v856, 24.0
        %vm921 = vcmp.le.f32.partialorder %v857, 24.0
        %vm922 = vcmp.le.f32.partialorder %v858, 24.0
        %vm923 = vcmp.le.f32.partialorder %v859, 24.0
        %vm924 = vcmp.le.f32.partialorder %v860, 24.0
        %vm925 = vcmp.le.f32.partialorder %v861, 24.0
        %vm926 = vcmp.le.f32.partialorder %v862, 24.0
        %vm927 = vcmp.le.f32.partialorder %v863, 24.0
        %vm928 = vcmp.le.f32.partialorder %v864, 24.0
        %vm929 = vcmp.le.f32.partialorder %v865, 24.0
        %vm930 = vcmp.le.f32.partialorder %v866, 24.0
        %vm931 = vcmp.le.f32.partialorder %v867, 24.0
        %vm932 = vcmp.le.f32.partialorder %v868, 24.0
        %vm933 = vcmp.le.f32.partialorder %v869, 24.0
        %vm934 = vcmp.le.f32.partialorder %v870, 24.0
        %vm935 = vcmp.le.f32.partialorder %v871, 24.0
        %vm936 = vcmp.le.f32.partialorder %v872, 24.0
        %vm937 = vcmp.le.f32.partialorder %v873, 24.0
        %vm938 = vcmp.le.f32.partialorder %v874, 24.0
        %vm939 = vcmp.le.f32.partialorder %v875, 24.0
        %vm940 = vcmp.le.f32.partialorder %v876, 24.0
        %vm941 = vcmp.le.f32.partialorder %v877, 24.0
        %vm942 = vcmp.le.f32.partialorder %v878, 24.0
        %vm943 = vcmp.le.f32.partialorder %v879, 24.0
        %vm944 = vcmp.le.f32.partialorder %v880, 24.0
        %vm945 = vcmp.le.f32.partialorder %v881, 24.0
        %vm946 = vcmp.le.f32.partialorder %v882, 24.0
        %vm947 = vcmp.le.f32.partialorder %v883, 24.0
        %vm948 = vcmp.le.f32.partialorder %v884, 24.0
        %vm949 = vcmp.le.f32.partialorder %v885, 24.0
        %vm950 = vcmp.le.f32.partialorder %v886, 24.0
        %vm951 = vmand %vm759, %vm887
        %vm952 = vmand %vm760, %vm888
        %vm953 = vmand %vm761, %vm889
        %vm954 = vmand %vm762, %vm890
        %vm955 = vmand %vm763, %vm891
        %vm956 = vmand %vm764, %vm892
        %vm957 = vmand %vm765, %vm893
        %vm958 = vmand %vm766, %vm894
        %vm959 = vmand %vm767, %vm895
        %vm960 = vmand %vm768, %vm896
        %vm961 = vmand %vm769, %vm897
        %vm962 = vmand %vm770, %vm898
        %vm963 = vmand %vm771, %vm899
        %vm964 = vmand %vm772, %vm900
        %vm965 = vmand %vm773, %vm901
        %vm966 = vmand %vm774, %vm902
        %vm967 = vmand %vm775, %vm903
        %vm968 = vmand %vm776, %vm904
        %vm969 = vmand %vm777, %vm905
        %vm970 = vmand %vm778, %vm906
        %vm971 = vmand %vm779, %vm907
        %vm972 = vmand %vm780, %vm908
        %vm973 = vmand %vm781, %vm909
        %vm974 = vmand %vm782, %vm910
        %vm975 = vmand %vm783, %vm911
        %vm976 = vmand %vm784, %vm912
        %vm977 = vmand %vm785, %vm913
        %vm978 = vmand %vm786, %vm914
        %vm979 = vmand %vm787, %vm915
        %vm980 = vmand %vm788, %vm916
        %vm981 = vmand %vm789, %vm917
        %vm982 = vmand %vm790, %vm918
        %vm983 = vmand %vm791, %vm919
        %vm984 = vmand %vm792, %vm920
        %vm985 = vmand %vm793, %vm921
        %vm986 = vmand %vm794, %vm922
        %vm987 = vmand %vm795, %vm923
        %vm988 = vmand %vm796, %vm924
        %vm989 = vmand %vm797, %vm925
        %vm990 = vmand %vm798, %vm926
        %vm991 = vmand %vm799, %vm927
        %vm992 = vmand %vm800, %vm928
        %vm993 = vmand %vm801, %vm929
        %vm994 = vmand %vm802, %vm930
        %vm995 = vmand %vm803, %vm931
        %vm996 = vmand %vm804, %vm932
        %vm997 = vmand %vm805, %vm933
        %vm998 = vmand %vm806, %vm934
        %vm999 = vmand %vm807, %vm935
        %vm1000 = vmand %vm808, %vm936
        %vm1001 = vmand %vm809, %vm937
        %vm1002 = vmand %vm810, %vm938
        %vm1003 = vmand %vm811, %vm939
        %vm1004 = vmand %vm812, %vm940
        %vm1005 = vmand %vm813, %vm941
        %vm1006 = vmand %vm814, %vm942
        %vm1007 = vmand %vm815, %vm943
        %vm1008 = vmand %vm816, %vm944
        %vm1009 = vmand %vm817, %vm945
        %vm1010 = vmand %vm818, %vm946
        %vm1011 = vmand %vm819, %vm947
        %vm1012 = vmand %vm820, %vm948
        %vm1013 = vmand %vm821, %vm949
        %vm1014 = vmand %vm822, %vm950
        %vm1015 = vcmask 23552
        %v1016 = vsel %vm1015, %v241, 0
        %v1018 = vsel %vm1015, %v242, 0
        %v1020 = vsel %vm1015, %v243, 0
        %v1022 = vsel %vm1015, %v244, 0
        %v1024 = vsel %vm1015, %v245, 0
        %v1026 = vsel %vm1015, %v246, 0
        %v1028 = vsel %vm1015, %v247, 0
        %v1030 = vsel %vm1015, %v248, 0
        %v1032 = vsel %vm1015, %v249, 0
        %v1034 = vsel %vm1015, %v250, 0
        %v1036 = vsel %vm1015, %v251, 0
        %v1038 = vsel %vm1015, %v252, 0
        %v1040 = vsel %vm1015, %v253, 0
        %v1042 = vsel %vm1015, %v254, 0
        %v1044 = vsel %vm1015, %v255, 0
        %v1046 = vsel %vm1015, %v256, 0
        %v1048 = vsel %vm1015, %v257, 0
        %v1050 = vsel %vm1015, %v258, 0
        %v1052 = vsel %vm1015, %v259, 0
        %v1054 = vsel %vm1015, %v260, 0
        %v1056 = vsel %vm1015, %v261, 0
        %v1058 = vsel %vm1015, %v262, 0
        %v1060 = vsel %vm1015, %v263, 0
        %v1062 = vsel %vm1015, %v264, 0
        %v1064 = vsel %vm1015, %v265, 0
        %v1066 = vsel %vm1015, %v266, 0
        %v1068 = vsel %vm1015, %v267, 0
        %v1070 = vsel %vm1015, %v268, 0
        %v1072 = vsel %vm1015, %v269, 0
        %v1074 = vsel %vm1015, %v270, 0
        %v1076 = vsel %vm1015, %v271, 0
        %v1078 = vsel %vm1015, %v272, 0
        %vm1080 = vcmask 1042432
        %v1082 = vsel %vm1080, %v273, 0
        %v1085 = vsel %vm1080, %v274, 0
        %1087 = vmatpush.msra.mxu0 0.0
        %1088 = vmatpush.msra.mxu0 0.0
        %1089 = vmatpush.msra.mxu0 0.0
        %1090 = vmatpush.msra.mxu0 0.0
        %1091 = vmatpush.msra.mxu0 0.0
        %1092 = vmatpush.msra.mxu0 0.0
        %1093 = vmatpush.msra.mxu0 0.0
        %1094 = vmatpush.msra.mxu0 0.0
        %1095 = vmatpush.msra.mxu0 0.0
        %1096 = vmatpush.msra.mxu0 0.0
        %1097 = vmatpush.msra.mxu0 0.0
        %1098 = vmatpush.msra.mxu0 0.0
        %1099 = vmatpush.msra.mxu0 0.0
        %1100 = vmatpush.msra.mxu0 0.0
        %1101 = vmatpush.msra.mxu0 0.0
        %1102 = vmatpush.msra.mxu0 %v1082
        %1103 = vmatmul.f32.gmra.mxu0 %v1016
        %v1104 = vpop.f32.mrf.mxu0
        %v1105 = vadd.f32 0.0, %v1104
        %1106 = vmatmul.f32.gmra.mxu0 %v1018
        %v1107 = vpop.f32.mrf.mxu0
        %v1108 = vadd.f32 0.0, %v1107
        %1109 = vmatmul.f32.gmra.mxu0 %v1020
        %v1110 = vpop.f32.mrf.mxu0
        %v1111 = vadd.f32 0.0, %v1110
        %1112 = vmatmul.f32.gmra.mxu0 %v1022
        %v1113 = vpop.f32.mrf.mxu0
        %v1114 = vadd.f32 0.0, %v1113
        %1115 = vmatmul.f32.gmra.mxu0 %v1024
        %v1116 = vpop.f32.mrf.mxu0
        %v1117 = vadd.f32 0.0, %v1116
        %1118 = vmatmul.f32.gmra.mxu0 %v1026
        %v1119 = vpop.f32.mrf.mxu0
        %v1120 = vadd.f32 0.0, %v1119
        %1121 = vmatmul.f32.gmra.mxu0 %v1028
        %v1122 = vpop.f32.mrf.mxu0
        %v1123 = vadd.f32 0.0, %v1122
        %1124 = vmatmul.f32.gmra.mxu0 %v1030
        %v1125 = vpop.f32.mrf.mxu0
        %v1126 = vadd.f32 0.0, %v1125
        %1127 = vmatmul.f32.gmra.mxu0 %v1032
        %v1128 = vpop.f32.mrf.mxu0
        %v1129 = vadd.f32 0.0, %v1128
        %1130 = vmatmul.f32.gmra.mxu0 %v1034
        %v1131 = vpop.f32.mrf.mxu0
        %v1132 = vadd.f32 0.0, %v1131
        %1133 = vmatmul.f32.gmra.mxu0 %v1036
        %v1134 = vpop.f32.mrf.mxu0
        %v1135 = vadd.f32 0.0, %v1134
        %1136 = vmatmul.f32.gmra.mxu0 %v1038
        %v1137 = vpop.f32.mrf.mxu0
        %v1138 = vadd.f32 0.0, %v1137
        %1139 = vmatmul.f32.gmra.mxu0 %v1040
        %v1140 = vpop.f32.mrf.mxu0
        %v1141 = vadd.f32 0.0, %v1140
        %1142 = vmatmul.f32.gmra.mxu0 %v1042
        %v1143 = vpop.f32.mrf.mxu0
        %v1144 = vadd.f32 0.0, %v1143
        %1145 = vmatmul.f32.gmra.mxu0 %v1044
        %v1146 = vpop.f32.mrf.mxu0
        %v1147 = vadd.f32 0.0, %v1146
        %1148 = vmatmul.f32.gmra.mxu0 %v1046
        %v1149 = vpop.f32.mrf.mxu0
        %v1150 = vadd.f32 0.0, %v1149
        %1151 = vmatmul.f32.gmra.mxu0 %v1048
        %v1152 = vpop.f32.mrf.mxu0
        %v1153 = vadd.f32 0.0, %v1152
        %1154 = vmatmul.f32.gmra.mxu0 %v1050
        %v1155 = vpop.f32.mrf.mxu0
        %v1156 = vadd.f32 0.0, %v1155
        %1157 = vmatmul.f32.gmra.mxu0 %v1052
        %v1158 = vpop.f32.mrf.mxu0
        %v1159 = vadd.f32 0.0, %v1158
        %1160 = vmatmul.f32.gmra.mxu0 %v1054
        %v1161 = vpop.f32.mrf.mxu0
        %v1162 = vadd.f32 0.0, %v1161
        %1163 = vmatmul.f32.gmra.mxu0 %v1056
        %v1164 = vpop.f32.mrf.mxu0
        %v1165 = vadd.f32 0.0, %v1164
        %1166 = vmatmul.f32.gmra.mxu0 %v1058
        %v1167 = vpop.f32.mrf.mxu0
        %v1168 = vadd.f32 0.0, %v1167
        %1169 = vmatmul.f32.gmra.mxu0 %v1060
        %v1170 = vpop.f32.mrf.mxu0
        %v1171 = vadd.f32 0.0, %v1170
        %1172 = vmatmul.f32.gmra.mxu0 %v1062
        %v1173 = vpop.f32.mrf.mxu0
        %v1174 = vadd.f32 0.0, %v1173
        %1175 = vmatmul.f32.gmra.mxu0 %v1064
        %v1176 = vpop.f32.mrf.mxu0
        %v1177 = vadd.f32 0.0, %v1176
        %1178 = vmatmul.f32.gmra.mxu0 %v1066
        %v1179 = vpop.f32.mrf.mxu0
        %v1180 = vadd.f32 0.0, %v1179
        %1181 = vmatmul.f32.gmra.mxu0 %v1068
        %v1182 = vpop.f32.mrf.mxu0
        %v1183 = vadd.f32 0.0, %v1182
        %1184 = vmatmul.f32.gmra.mxu0 %v1070
        %v1185 = vpop.f32.mrf.mxu0
        %v1186 = vadd.f32 0.0, %v1185
        %1187 = vmatmul.f32.gmra.mxu0 %v1072
        %v1188 = vpop.f32.mrf.mxu0
        %v1189 = vadd.f32 0.0, %v1188
        %1190 = vmatmul.f32.gmra.mxu0 %v1074
        %v1191 = vpop.f32.mrf.mxu0
        %v1192 = vadd.f32 0.0, %v1191
        %1193 = vmatmul.f32.gmra.mxu0 %v1076
        %v1194 = vpop.f32.mrf.mxu0
        %v1195 = vadd.f32 0.0, %v1194
        %1196 = vmatmul.f32.gmra.mxu0 %v1078
        %v1197 = vpop.f32.mrf.mxu0
        %v1198 = vadd.f32 0.0, %v1197
        %1199 = vdwg.mxu0
        %1200 = vmatpush.msra.mxu0 0.0
        %1201 = vmatpush.msra.mxu0 0.0
        %1202 = vmatpush.msra.mxu0 0.0
        %1203 = vmatpush.msra.mxu0 0.0
        %1204 = vmatpush.msra.mxu0 0.0
        %1205 = vmatpush.msra.mxu0 0.0
        %1206 = vmatpush.msra.mxu0 0.0
        %1207 = vmatpush.msra.mxu0 0.0
        %1208 = vmatpush.msra.mxu0 0.0
        %1209 = vmatpush.msra.mxu0 0.0
        %1210 = vmatpush.msra.mxu0 0.0
        %1211 = vmatpush.msra.mxu0 0.0
        %1212 = vmatpush.msra.mxu0 0.0
        %1213 = vmatpush.msra.mxu0 0.0
        %1214 = vmatpush.msra.mxu0 0.0
        %1215 = vmatpush.msra.mxu0 %v1085
        %1216 = vmatmul.f32.gmra.mxu0 %v1016
        %v1217 = vpop.f32.mrf.mxu0
        %v1218 = vadd.f32 0.0, %v1217
        %1219 = vmatmul.f32.gmra.mxu0 %v1018
        %v1220 = vpop.f32.mrf.mxu0
        %v1221 = vadd.f32 0.0, %v1220
        %1222 = vmatmul.f32.gmra.mxu0 %v1020
        %v1223 = vpop.f32.mrf.mxu0
        %v1224 = vadd.f32 0.0, %v1223
        %1225 = vmatmul.f32.gmra.mxu0 %v1022
        %v1226 = vpop.f32.mrf.mxu0
        %v1227 = vadd.f32 0.0, %v1226
        %1228 = vmatmul.f32.gmra.mxu0 %v1024
        %v1229 = vpop.f32.mrf.mxu0
        %v1230 = vadd.f32 0.0, %v1229
        %1231 = vmatmul.f32.gmra.mxu0 %v1026
        %v1232 = vpop.f32.mrf.mxu0
        %v1233 = vadd.f32 0.0, %v1232
        %1234 = vmatmul.f32.gmra.mxu0 %v1028
        %v1235 = vpop.f32.mrf.mxu0
        %v1236 = vadd.f32 0.0, %v1235
        %1237 = vmatmul.f32.gmra.mxu0 %v1030
        %v1238 = vpop.f32.mrf.mxu0
        %v1239 = vadd.f32 0.0, %v1238
        %1240 = vmatmul.f32.gmra.mxu0 %v1032
        %v1241 = vpop.f32.mrf.mxu0
        %v1242 = vadd.f32 0.0, %v1241
        %1243 = vmatmul.f32.gmra.mxu0 %v1034
        %v1244 = vpop.f32.mrf.mxu0
        %v1245 = vadd.f32 0.0, %v1244
        %1246 = vmatmul.f32.gmra.mxu0 %v1036
        %v1247 = vpop.f32.mrf.mxu0
        %v1248 = vadd.f32 0.0, %v1247
        %1249 = vmatmul.f32.gmra.mxu0 %v1038
        %v1250 = vpop.f32.mrf.mxu0
        %v1251 = vadd.f32 0.0, %v1250
        %1252 = vmatmul.f32.gmra.mxu0 %v1040
        %v1253 = vpop.f32.mrf.mxu0
        %v1254 = vadd.f32 0.0, %v1253
        %1255 = vmatmul.f32.gmra.mxu0 %v1042
        %v1256 = vpop.f32.mrf.mxu0
        %v1257 = vadd.f32 0.0, %v1256
        %1258 = vmatmul.f32.gmra.mxu0 %v1044
        %v1259 = vpop.f32.mrf.mxu0
        %v1260 = vadd.f32 0.0, %v1259
        %1261 = vmatmul.f32.gmra.mxu0 %v1046
        %v1262 = vpop.f32.mrf.mxu0
        %v1263 = vadd.f32 0.0, %v1262
        %1264 = vmatmul.f32.gmra.mxu0 %v1048
        %v1265 = vpop.f32.mrf.mxu0
        %v1266 = vadd.f32 0.0, %v1265
        %1267 = vmatmul.f32.gmra.mxu0 %v1050
        %v1268 = vpop.f32.mrf.mxu0
        %v1269 = vadd.f32 0.0, %v1268
        %1270 = vmatmul.f32.gmra.mxu0 %v1052
        %v1271 = vpop.f32.mrf.mxu0
        %v1272 = vadd.f32 0.0, %v1271
        %1273 = vmatmul.f32.gmra.mxu0 %v1054
        %v1274 = vpop.f32.mrf.mxu0
        %v1275 = vadd.f32 0.0, %v1274
        %1276 = vmatmul.f32.gmra.mxu0 %v1056
        %v1277 = vpop.f32.mrf.mxu0
        %v1278 = vadd.f32 0.0, %v1277
        %1279 = vmatmul.f32.gmra.mxu0 %v1058
        %v1280 = vpop.f32.mrf.mxu0
        %v1281 = vadd.f32 0.0, %v1280
        %1282 = vmatmul.f32.gmra.mxu0 %v1060
        %v1283 = vpop.f32.mrf.mxu0
        %v1284 = vadd.f32 0.0, %v1283
        %1285 = vmatmul.f32.gmra.mxu0 %v1062
        %v1286 = vpop.f32.mrf.mxu0
        %v1287 = vadd.f32 0.0, %v1286
        %1288 = vmatmul.f32.gmra.mxu0 %v1064
        %v1289 = vpop.f32.mrf.mxu0
        %v1290 = vadd.f32 0.0, %v1289
        %1291 = vmatmul.f32.gmra.mxu0 %v1066
        %v1292 = vpop.f32.mrf.mxu0
        %v1293 = vadd.f32 0.0, %v1292
        %1294 = vmatmul.f32.gmra.mxu0 %v1068
        %v1295 = vpop.f32.mrf.mxu0
        %v1296 = vadd.f32 0.0, %v1295
        %1297 = vmatmul.f32.gmra.mxu0 %v1070
        %v1298 = vpop.f32.mrf.mxu0
        %v1299 = vadd.f32 0.0, %v1298
        %1300 = vmatmul.f32.gmra.mxu0 %v1072
        %v1301 = vpop.f32.mrf.mxu0
        %v1302 = vadd.f32 0.0, %v1301
        %1303 = vmatmul.f32.gmra.mxu0 %v1074
        %v1304 = vpop.f32.mrf.mxu0
        %v1305 = vadd.f32 0.0, %v1304
        %1306 = vmatmul.f32.gmra.mxu0 %v1076
        %v1307 = vpop.f32.mrf.mxu0
        %v1308 = vadd.f32 0.0, %v1307
        %1309 = vmatmul.f32.gmra.mxu0 %v1078
        %v1310 = vpop.f32.mrf.mxu0
        %v1311 = vadd.f32 0.0, %v1310
        %1312 = vdwg.mxu0
        %v1313 = vmul.f32 %v241, %v241
        %v1314 = vmul.f32 %v242, %v242
        %v1315 = vmul.f32 %v243, %v243
        %v1316 = vmul.f32 %v244, %v244
        %v1317 = vmul.f32 %v245, %v245
        %v1318 = vmul.f32 %v246, %v246
        %v1319 = vmul.f32 %v247, %v247
        %v1320 = vmul.f32 %v248, %v248
        %v1321 = vmul.f32 %v249, %v249
        %v1322 = vmul.f32 %v250, %v250
        %v1323 = vmul.f32 %v251, %v251
        %v1324 = vmul.f32 %v252, %v252
        %v1325 = vmul.f32 %v253, %v253
        %v1326 = vmul.f32 %v254, %v254
        %v1327 = vmul.f32 %v255, %v255
        %v1328 = vmul.f32 %v256, %v256
        %v1329 = vmul.f32 %v257, %v257
        %v1330 = vmul.f32 %v258, %v258
        %v1331 = vmul.f32 %v259, %v259
        %v1332 = vmul.f32 %v260, %v260
        %v1333 = vmul.f32 %v261, %v261
        %v1334 = vmul.f32 %v262, %v262
        %v1335 = vmul.f32 %v263, %v263
        %v1336 = vmul.f32 %v264, %v264
        %v1337 = vmul.f32 %v265, %v265
        %v1338 = vmul.f32 %v266, %v266
        %v1339 = vmul.f32 %v267, %v267
        %v1340 = vmul.f32 %v268, %v268
        %v1341 = vmul.f32 %v269, %v269
        %v1342 = vmul.f32 %v270, %v270
        %v1343 = vmul.f32 %v271, %v271
        %v1344 = vmul.f32 %v272, %v272
        %v1345 = vsel %vm1015, %v1313, 0.0
        %1346 = vadd.xlane.f32.xlu0 %v1345
        %v1347 = vpop.xlane.xlu0 %1346
        %v1348 = vsel %vm1015, %v1314, 0.0
        %1349 = vadd.xlane.f32.xlu0 %v1348
        %v1350 = vpop.xlane.xlu0 %1349
        %v1351 = vsel %vm1015, %v1315, 0.0
        %1352 = vadd.xlane.f32.xlu0 %v1351
        %v1353 = vpop.xlane.xlu0 %1352
        %v1354 = vsel %vm1015, %v1316, 0.0
        %1355 = vadd.xlane.f32.xlu0 %v1354
        %v1356 = vpop.xlane.xlu0 %1355
        %v1357 = vsel %vm1015, %v1317, 0.0
        %1358 = vadd.xlane.f32.xlu0 %v1357
        %v1359 = vpop.xlane.xlu0 %1358
        %v1360 = vsel %vm1015, %v1318, 0.0
        %1361 = vadd.xlane.f32.xlu0 %v1360
        %v1362 = vpop.xlane.xlu0 %1361
        %v1363 = vsel %vm1015, %v1319, 0.0
        %1364 = vadd.xlane.f32.xlu0 %v1363
        %v1365 = vpop.xlane.xlu0 %1364
        %v1366 = vsel %vm1015, %v1320, 0.0
        %1367 = vadd.xlane.f32.xlu0 %v1366
        %v1368 = vpop.xlane.xlu0 %1367
        %v1369 = vsel %vm1015, %v1321, 0.0
        %1370 = vadd.xlane.f32.xlu0 %v1369
        %v1371 = vpop.xlane.xlu0 %1370
        %v1372 = vsel %vm1015, %v1322, 0.0
        %1373 = vadd.xlane.f32.xlu0 %v1372
        %v1374 = vpop.xlane.xlu0 %1373
        %v1375 = vsel %vm1015, %v1323, 0.0
        %1376 = vadd.xlane.f32.xlu0 %v1375
        %v1377 = vpop.xlane.xlu0 %1376
        %v1378 = vsel %vm1015, %v1324, 0.0
        %1379 = vadd.xlane.f32.xlu0 %v1378
        %v1380 = vpop.xlane.xlu0 %1379
        %v1381 = vsel %vm1015, %v1325, 0.0
        %1382 = vadd.xlane.f32.xlu0 %v1381
        %v1383 = vpop.xlane.xlu0 %1382
        %v1384 = vsel %vm1015, %v1326, 0.0
        %1385 = vadd.xlane.f32.xlu0 %v1384
        %v1386 = vpop.xlane.xlu0 %1385
        %v1387 = vsel %vm1015, %v1327, 0.0
        %1388 = vadd.xlane.f32.xlu0 %v1387
        %v1389 = vpop.xlane.xlu0 %1388
        %v1390 = vsel %vm1015, %v1328, 0.0
        %1391 = vadd.xlane.f32.xlu0 %v1390
        %v1392 = vpop.xlane.xlu0 %1391
        %v1393 = vsel %vm1015, %v1329, 0.0
        %1394 = vadd.xlane.f32.xlu0 %v1393
        %v1395 = vpop.xlane.xlu0 %1394
        %v1396 = vsel %vm1015, %v1330, 0.0
        %1397 = vadd.xlane.f32.xlu0 %v1396
        %v1398 = vpop.xlane.xlu0 %1397
        %v1399 = vsel %vm1015, %v1331, 0.0
        %1400 = vadd.xlane.f32.xlu0 %v1399
        %v1401 = vpop.xlane.xlu0 %1400
        %v1402 = vsel %vm1015, %v1332, 0.0
        %1403 = vadd.xlane.f32.xlu0 %v1402
        %v1404 = vpop.xlane.xlu0 %1403
        %v1405 = vsel %vm1015, %v1333, 0.0
        %1406 = vadd.xlane.f32.xlu0 %v1405
        %v1407 = vpop.xlane.xlu0 %1406
        %v1408 = vsel %vm1015, %v1334, 0.0
        %1409 = vadd.xlane.f32.xlu0 %v1408
        %v1410 = vpop.xlane.xlu0 %1409
        %v1411 = vsel %vm1015, %v1335, 0.0
        %1412 = vadd.xlane.f32.xlu0 %v1411
        %v1413 = vpop.xlane.xlu0 %1412
        %v1414 = vsel %vm1015, %v1336, 0.0
        %1415 = vadd.xlane.f32.xlu0 %v1414
        %v1416 = vpop.xlane.xlu0 %1415
        %v1417 = vsel %vm1015, %v1337, 0.0
        %1418 = vadd.xlane.f32.xlu0 %v1417
        %v1419 = vpop.xlane.xlu0 %1418
        %v1420 = vsel %vm1015, %v1338, 0.0
        %1421 = vadd.xlane.f32.xlu0 %v1420
        %v1422 = vpop.xlane.xlu0 %1421
        %v1423 = vsel %vm1015, %v1339, 0.0
        %1424 = vadd.xlane.f32.xlu0 %v1423
        %v1425 = vpop.xlane.xlu0 %1424
        %v1426 = vsel %vm1015, %v1340, 0.0
        %1427 = vadd.xlane.f32.xlu0 %v1426
        %v1428 = vpop.xlane.xlu0 %1427
        %v1429 = vsel %vm1015, %v1341, 0.0
        %1430 = vadd.xlane.f32.xlu0 %v1429
        %v1431 = vpop.xlane.xlu0 %1430
        %v1432 = vsel %vm1015, %v1342, 0.0
        %1433 = vadd.xlane.f32.xlu0 %v1432
        %v1434 = vpop.xlane.xlu0 %1433
        %v1435 = vsel %vm1015, %v1343, 0.0
        %1436 = vadd.xlane.f32.xlu0 %v1435
        %v1437 = vpop.xlane.xlu0 %1436
        %v1438 = vsel %vm1015, %v1344, 0.0
        %1439 = vadd.xlane.f32.xlu0 %v1438
        %v1440 = vpop.xlane.xlu0 %1439
        %v1441 = vmul.f32 %v273, %v273
        %v1442 = vmul.f32 %v274, %v274
        %v1443 = vsel %vm1080, %v1441, 0.0
        %v1444 = vrot.slane %v1443, 4
        %v1445 = vadd.f32 %v1443, %v1444
        %v1446 = vrot.slane %v1445, 2
        %v1447 = vadd.f32 %v1445, %v1446
        %v1448 = vrot.slane %v1447, 1
        %v1449 = vadd.f32 %v1447, %v1448
        %v1450 = vsel %vm1080, %v1442, 0.0
        %v1451 = vrot.slane %v1450, 4
        %v1452 = vadd.f32 %v1450, %v1451
        %v1453 = vrot.slane %v1452, 2
        %v1454 = vadd.f32 %v1452, %v1453
        %v1455 = vrot.slane %v1454, 1
        %v1456 = vadd.f32 %v1454, %v1455
        %v1457 = vadd.f32 %v1347, %v1449
        %v1458 = vadd.f32 %v1347, %v1456
        %v1459 = vadd.f32 %v1350, %v1449
        %v1460 = vadd.f32 %v1350, %v1456
        %v1461 = vadd.f32 %v1353, %v1449
        %v1462 = vadd.f32 %v1353, %v1456
        %v1463 = vadd.f32 %v1356, %v1449
        %v1464 = vadd.f32 %v1356, %v1456
        %v1465 = vadd.f32 %v1359, %v1449
        %v1466 = vadd.f32 %v1359, %v1456
        %v1467 = vadd.f32 %v1362, %v1449
        %v1468 = vadd.f32 %v1362, %v1456
        %v1469 = vadd.f32 %v1365, %v1449
        %v1470 = vadd.f32 %v1365, %v1456
        %v1471 = vadd.f32 %v1368, %v1449
        %v1472 = vadd.f32 %v1368, %v1456
        %v1473 = vadd.f32 %v1371, %v1449
        %v1474 = vadd.f32 %v1371, %v1456
        %v1475 = vadd.f32 %v1374, %v1449
        %v1476 = vadd.f32 %v1374, %v1456
        %v1477 = vadd.f32 %v1377, %v1449
        %v1478 = vadd.f32 %v1377, %v1456
        %v1479 = vadd.f32 %v1380, %v1449
        %v1480 = vadd.f32 %v1380, %v1456
        %v1481 = vadd.f32 %v1383, %v1449
        %v1482 = vadd.f32 %v1383, %v1456
        %v1483 = vadd.f32 %v1386, %v1449
        %v1484 = vadd.f32 %v1386, %v1456
        %v1485 = vadd.f32 %v1389, %v1449
        %v1486 = vadd.f32 %v1389, %v1456
        %v1487 = vadd.f32 %v1392, %v1449
        %v1488 = vadd.f32 %v1392, %v1456
        %v1489 = vadd.f32 %v1395, %v1449
        %v1490 = vadd.f32 %v1395, %v1456
        %v1491 = vadd.f32 %v1398, %v1449
        %v1492 = vadd.f32 %v1398, %v1456
        %v1493 = vadd.f32 %v1401, %v1449
        %v1494 = vadd.f32 %v1401, %v1456
        %v1495 = vadd.f32 %v1404, %v1449
        %v1496 = vadd.f32 %v1404, %v1456
        %v1497 = vadd.f32 %v1407, %v1449
        %v1498 = vadd.f32 %v1407, %v1456
        %v1499 = vadd.f32 %v1410, %v1449
        %v1500 = vadd.f32 %v1410, %v1456
        %v1501 = vadd.f32 %v1413, %v1449
        %v1502 = vadd.f32 %v1413, %v1456
        %v1503 = vadd.f32 %v1416, %v1449
        %v1504 = vadd.f32 %v1416, %v1456
        %v1505 = vadd.f32 %v1419, %v1449
        %v1506 = vadd.f32 %v1419, %v1456
        %v1507 = vadd.f32 %v1422, %v1449
        %v1508 = vadd.f32 %v1422, %v1456
        %v1509 = vadd.f32 %v1425, %v1449
        %v1510 = vadd.f32 %v1425, %v1456
        %v1511 = vadd.f32 %v1428, %v1449
        %v1512 = vadd.f32 %v1428, %v1456
        %v1513 = vadd.f32 %v1431, %v1449
        %v1514 = vadd.f32 %v1431, %v1456
        %v1515 = vadd.f32 %v1434, %v1449
        %v1516 = vadd.f32 %v1434, %v1456
        %v1517 = vadd.f32 %v1437, %v1449
        %v1518 = vadd.f32 %v1437, %v1456
        %v1519 = vadd.f32 %v1440, %v1449
        %v1520 = vadd.f32 %v1440, %v1456
        %v1521 = vmul.f32 %v1105, 2.0
        %v1522 = vmul.f32 %v1218, 2.0
        %v1523 = vmul.f32 %v1108, 2.0
        %v1524 = vmul.f32 %v1221, 2.0
        %v1525 = vmul.f32 %v1111, 2.0
        %v1526 = vmul.f32 %v1224, 2.0
        %v1527 = vmul.f32 %v1114, 2.0
        %v1528 = vmul.f32 %v1227, 2.0
        %v1529 = vmul.f32 %v1117, 2.0
        %v1530 = vmul.f32 %v1230, 2.0
        %v1531 = vmul.f32 %v1120, 2.0
        %v1532 = vmul.f32 %v1233, 2.0
        %v1533 = vmul.f32 %v1123, 2.0
        %v1534 = vmul.f32 %v1236, 2.0
        %v1535 = vmul.f32 %v1126, 2.0
        %v1536 = vmul.f32 %v1239, 2.0
        %v1537 = vmul.f32 %v1129, 2.0
        %v1538 = vmul.f32 %v1242, 2.0
        %v1539 = vmul.f32 %v1132, 2.0
        %v1540 = vmul.f32 %v1245, 2.0
        %v1541 = vmul.f32 %v1135, 2.0
        %v1542 = vmul.f32 %v1248, 2.0
        %v1543 = vmul.f32 %v1138, 2.0
        %v1544 = vmul.f32 %v1251, 2.0
        %v1545 = vmul.f32 %v1141, 2.0
        %v1546 = vmul.f32 %v1254, 2.0
        %v1547 = vmul.f32 %v1144, 2.0
        %v1548 = vmul.f32 %v1257, 2.0
        %v1549 = vmul.f32 %v1147, 2.0
        %v1550 = vmul.f32 %v1260, 2.0
        %v1551 = vmul.f32 %v1150, 2.0
        %v1552 = vmul.f32 %v1263, 2.0
        %v1553 = vmul.f32 %v1153, 2.0
        %v1554 = vmul.f32 %v1266, 2.0
        %v1555 = vmul.f32 %v1156, 2.0
        %v1556 = vmul.f32 %v1269, 2.0
        %v1557 = vmul.f32 %v1159, 2.0
        %v1558 = vmul.f32 %v1272, 2.0
        %v1559 = vmul.f32 %v1162, 2.0
        %v1560 = vmul.f32 %v1275, 2.0
        %v1561 = vmul.f32 %v1165, 2.0
        %v1562 = vmul.f32 %v1278, 2.0
        %v1563 = vmul.f32 %v1168, 2.0
        %v1564 = vmul.f32 %v1281, 2.0
        %v1565 = vmul.f32 %v1171, 2.0
        %v1566 = vmul.f32 %v1284, 2.0
        %v1567 = vmul.f32 %v1174, 2.0
        %v1568 = vmul.f32 %v1287, 2.0
        %v1569 = vmul.f32 %v1177, 2.0
        %v1570 = vmul.f32 %v1290, 2.0
        %v1571 = vmul.f32 %v1180, 2.0
        %v1572 = vmul.f32 %v1293, 2.0
        %v1573 = vmul.f32 %v1183, 2.0
        %v1574 = vmul.f32 %v1296, 2.0
        %v1575 = vmul.f32 %v1186, 2.0
        %v1576 = vmul.f32 %v1299, 2.0
        %v1577 = vmul.f32 %v1189, 2.0
        %v1578 = vmul.f32 %v1302, 2.0
        %v1579 = vmul.f32 %v1192, 2.0
        %v1580 = vmul.f32 %v1305, 2.0
        %v1581 = vmul.f32 %v1195, 2.0
        %v1582 = vmul.f32 %v1308, 2.0
        %v1583 = vmul.f32 %v1198, 2.0
        %v1584 = vmul.f32 %v1311, 2.0
        %v1585 = vsub.f32 %v1457, %v1521
        %v1586 = vsub.f32 %v1458, %v1522
        %v1587 = vsub.f32 %v1459, %v1523
        %v1588 = vsub.f32 %v1460, %v1524
        %v1589 = vsub.f32 %v1461, %v1525
        %v1590 = vsub.f32 %v1462, %v1526
        %v1591 = vsub.f32 %v1463, %v1527
        %v1592 = vsub.f32 %v1464, %v1528
        %v1593 = vsub.f32 %v1465, %v1529
        %v1594 = vsub.f32 %v1466, %v1530
        %v1595 = vsub.f32 %v1467, %v1531
        %v1596 = vsub.f32 %v1468, %v1532
        %v1597 = vsub.f32 %v1469, %v1533
        %v1598 = vsub.f32 %v1470, %v1534
        %v1599 = vsub.f32 %v1471, %v1535
        %v1600 = vsub.f32 %v1472, %v1536
        %v1601 = vsub.f32 %v1473, %v1537
        %v1602 = vsub.f32 %v1474, %v1538
        %v1603 = vsub.f32 %v1475, %v1539
        %v1604 = vsub.f32 %v1476, %v1540
        %v1605 = vsub.f32 %v1477, %v1541
        %v1606 = vsub.f32 %v1478, %v1542
        %v1607 = vsub.f32 %v1479, %v1543
        %v1608 = vsub.f32 %v1480, %v1544
        %v1609 = vsub.f32 %v1481, %v1545
        %v1610 = vsub.f32 %v1482, %v1546
        %v1611 = vsub.f32 %v1483, %v1547
        %v1612 = vsub.f32 %v1484, %v1548
        %v1613 = vsub.f32 %v1485, %v1549
        %v1614 = vsub.f32 %v1486, %v1550
        %v1615 = vsub.f32 %v1487, %v1551
        %v1616 = vsub.f32 %v1488, %v1552
        %v1617 = vsub.f32 %v1489, %v1553
        %v1618 = vsub.f32 %v1490, %v1554
        %v1619 = vsub.f32 %v1491, %v1555
        %v1620 = vsub.f32 %v1492, %v1556
        %v1621 = vsub.f32 %v1493, %v1557
        %v1622 = vsub.f32 %v1494, %v1558
        %v1623 = vsub.f32 %v1495, %v1559
        %v1624 = vsub.f32 %v1496, %v1560
        %v1625 = vsub.f32 %v1497, %v1561
        %v1626 = vsub.f32 %v1498, %v1562
        %v1627 = vsub.f32 %v1499, %v1563
        %v1628 = vsub.f32 %v1500, %v1564
        %v1629 = vsub.f32 %v1501, %v1565
        %v1630 = vsub.f32 %v1502, %v1566
        %v1631 = vsub.f32 %v1503, %v1567
        %v1632 = vsub.f32 %v1504, %v1568
        %v1633 = vsub.f32 %v1505, %v1569
        %v1634 = vsub.f32 %v1506, %v1570
        %v1635 = vsub.f32 %v1507, %v1571
        %v1636 = vsub.f32 %v1508, %v1572
        %v1637 = vsub.f32 %v1509, %v1573
        %v1638 = vsub.f32 %v1510, %v1574
        %v1639 = vsub.f32 %v1511, %v1575
        %v1640 = vsub.f32 %v1512, %v1576
        %v1641 = vsub.f32 %v1513, %v1577
        %v1642 = vsub.f32 %v1514, %v1578
        %v1643 = vsub.f32 %v1515, %v1579
        %v1644 = vsub.f32 %v1516, %v1580
        %v1645 = vsub.f32 %v1517, %v1581
        %v1646 = vsub.f32 %v1518, %v1582
        %v1647 = vsub.f32 %v1519, %v1583
        %v1648 = vsub.f32 %v1520, %v1584
        %v1649 = vmax.f32 %v1585, 0.0
        %v1650 = vmax.f32 %v1586, 0.0
        %v1651 = vmax.f32 %v1587, 0.0
        %v1652 = vmax.f32 %v1588, 0.0
        %v1653 = vmax.f32 %v1589, 0.0
        %v1654 = vmax.f32 %v1590, 0.0
        %v1655 = vmax.f32 %v1591, 0.0
        %v1656 = vmax.f32 %v1592, 0.0
        %v1657 = vmax.f32 %v1593, 0.0
        %v1658 = vmax.f32 %v1594, 0.0
        %v1659 = vmax.f32 %v1595, 0.0
        %v1660 = vmax.f32 %v1596, 0.0
        %v1661 = vmax.f32 %v1597, 0.0
        %v1662 = vmax.f32 %v1598, 0.0
        %v1663 = vmax.f32 %v1599, 0.0
        %v1664 = vmax.f32 %v1600, 0.0
        %v1665 = vmax.f32 %v1601, 0.0
        %v1666 = vmax.f32 %v1602, 0.0
        %v1667 = vmax.f32 %v1603, 0.0
        %v1668 = vmax.f32 %v1604, 0.0
        %v1669 = vmax.f32 %v1605, 0.0
        %v1670 = vmax.f32 %v1606, 0.0
        %v1671 = vmax.f32 %v1607, 0.0
        %v1672 = vmax.f32 %v1608, 0.0
        %v1673 = vmax.f32 %v1609, 0.0
        %v1674 = vmax.f32 %v1610, 0.0
        %v1675 = vmax.f32 %v1611, 0.0
        %v1676 = vmax.f32 %v1612, 0.0
        %v1677 = vmax.f32 %v1613, 0.0
        %v1678 = vmax.f32 %v1614, 0.0
        %v1679 = vmax.f32 %v1615, 0.0
        %v1680 = vmax.f32 %v1616, 0.0
        %v1681 = vmax.f32 %v1617, 0.0
        %v1682 = vmax.f32 %v1618, 0.0
        %v1683 = vmax.f32 %v1619, 0.0
        %v1684 = vmax.f32 %v1620, 0.0
        %v1685 = vmax.f32 %v1621, 0.0
        %v1686 = vmax.f32 %v1622, 0.0
        %v1687 = vmax.f32 %v1623, 0.0
        %v1688 = vmax.f32 %v1624, 0.0
        %v1689 = vmax.f32 %v1625, 0.0
        %v1690 = vmax.f32 %v1626, 0.0
        %v1691 = vmax.f32 %v1627, 0.0
        %v1692 = vmax.f32 %v1628, 0.0
        %v1693 = vmax.f32 %v1629, 0.0
        %v1694 = vmax.f32 %v1630, 0.0
        %v1695 = vmax.f32 %v1631, 0.0
        %v1696 = vmax.f32 %v1632, 0.0
        %v1697 = vmax.f32 %v1633, 0.0
        %v1698 = vmax.f32 %v1634, 0.0
        %v1699 = vmax.f32 %v1635, 0.0
        %v1700 = vmax.f32 %v1636, 0.0
        %v1701 = vmax.f32 %v1637, 0.0
        %v1702 = vmax.f32 %v1638, 0.0
        %v1703 = vmax.f32 %v1639, 0.0
        %v1704 = vmax.f32 %v1640, 0.0
        %v1705 = vmax.f32 %v1641, 0.0
        %v1706 = vmax.f32 %v1642, 0.0
        %v1707 = vmax.f32 %v1643, 0.0
        %v1708 = vmax.f32 %v1644, 0.0
        %v1709 = vmax.f32 %v1645, 0.0
        %v1710 = vmax.f32 %v1646, 0.0
        %v1711 = vmax.f32 %v1647, 0.0
        %v1712 = vmax.f32 %v1648, 0.0
        %v1713 = vmul.f32 %v437, %v437
        %v1714 = vmul.f32 %v438, %v438
        %v1715 = vmul.f32 %v439, %v439
        %v1716 = vmul.f32 %v440, %v440
        %v1717 = vmul.f32 %v441, %v441
        %v1718 = vmul.f32 %v442, %v442
        %v1719 = vmul.f32 %v443, %v443
        %v1720 = vmul.f32 %v444, %v444
        %v1721 = vmul.f32 %v445, %v445
        %v1722 = vmul.f32 %v446, %v446
        %v1723 = vmul.f32 %v447, %v447
        %v1724 = vmul.f32 %v448, %v448
        %v1725 = vmul.f32 %v449, %v449
        %v1726 = vmul.f32 %v450, %v450
        %v1727 = vmul.f32 %v451, %v451
        %v1728 = vmul.f32 %v452, %v452
        %v1729 = vmul.f32 %v453, %v453
        %v1730 = vmul.f32 %v454, %v454
        %v1731 = vmul.f32 %v455, %v455
        %v1732 = vmul.f32 %v456, %v456
        %v1733 = vmul.f32 %v457, %v457
        %v1734 = vmul.f32 %v458, %v458
        %v1735 = vmul.f32 %v459, %v459
        %v1736 = vmul.f32 %v460, %v460
        %v1737 = vmul.f32 %v461, %v461
        %v1738 = vmul.f32 %v462, %v462
        %v1739 = vmul.f32 %v463, %v463
        %v1740 = vmul.f32 %v464, %v464
        %v1741 = vmul.f32 %v465, %v465
        %v1742 = vmul.f32 %v466, %v466
        %v1743 = vmul.f32 %v467, %v467
        %v1744 = vmul.f32 %v468, %v468
        %v1745 = vmul.f32 %v469, %v469
        %v1746 = vmul.f32 %v470, %v470
        %v1747 = vmul.f32 %v471, %v471
        %v1748 = vmul.f32 %v472, %v472
        %v1749 = vmul.f32 %v473, %v473
        %v1750 = vmul.f32 %v474, %v474
        %v1751 = vmul.f32 %v475, %v475
        %v1752 = vmul.f32 %v476, %v476
        %v1753 = vmul.f32 %v477, %v477
        %v1754 = vmul.f32 %v478, %v478
        %v1755 = vmul.f32 %v479, %v479
        %v1756 = vmul.f32 %v480, %v480
        %v1757 = vmul.f32 %v481, %v481
        %v1758 = vmul.f32 %v482, %v482
        %v1759 = vmul.f32 %v483, %v483
        %v1760 = vmul.f32 %v484, %v484
        %v1761 = vmul.f32 %v485, %v485
        %v1762 = vmul.f32 %v486, %v486
        %v1763 = vmul.f32 %v487, %v487
        %v1764 = vmul.f32 %v488, %v488
        %v1765 = vmul.f32 %v489, %v489
        %v1766 = vmul.f32 %v490, %v490
        %v1767 = vmul.f32 %v491, %v491
        %v1768 = vmul.f32 %v492, %v492
        %v1769 = vmul.f32 %v493, %v493
        %v1770 = vmul.f32 %v494, %v494
        %v1771 = vmul.f32 %v495, %v495
        %v1772 = vmul.f32 %v496, %v496
        %v1773 = vmul.f32 %v497, %v497
        %v1774 = vmul.f32 %v498, %v498
        %v1775 = vmul.f32 %v499, %v499
        %v1776 = vmul.f32 %v500, %v500
        %v1777 = vadd.f32 %v1649, %v1713
        %v1778 = vadd.f32 %v1650, %v1714
        %v1779 = vadd.f32 %v1651, %v1715
        %v1780 = vadd.f32 %v1652, %v1716
        %v1781 = vadd.f32 %v1653, %v1717
        %v1782 = vadd.f32 %v1654, %v1718
        %v1783 = vadd.f32 %v1655, %v1719
        %v1784 = vadd.f32 %v1656, %v1720
        %v1785 = vadd.f32 %v1657, %v1721
        %v1786 = vadd.f32 %v1658, %v1722
        %v1787 = vadd.f32 %v1659, %v1723
        %v1788 = vadd.f32 %v1660, %v1724
        %v1789 = vadd.f32 %v1661, %v1725
        %v1790 = vadd.f32 %v1662, %v1726
        %v1791 = vadd.f32 %v1663, %v1727
        %v1792 = vadd.f32 %v1664, %v1728
        %v1793 = vadd.f32 %v1665, %v1729
        %v1794 = vadd.f32 %v1666, %v1730
        %v1795 = vadd.f32 %v1667, %v1731
        %v1796 = vadd.f32 %v1668, %v1732
        %v1797 = vadd.f32 %v1669, %v1733
        %v1798 = vadd.f32 %v1670, %v1734
        %v1799 = vadd.f32 %v1671, %v1735
        %v1800 = vadd.f32 %v1672, %v1736
        %v1801 = vadd.f32 %v1673, %v1737
        %v1802 = vadd.f32 %v1674, %v1738
        %v1803 = vadd.f32 %v1675, %v1739
        %v1804 = vadd.f32 %v1676, %v1740
        %v1805 = vadd.f32 %v1677, %v1741
        %v1806 = vadd.f32 %v1678, %v1742
        %v1807 = vadd.f32 %v1679, %v1743
        %v1808 = vadd.f32 %v1680, %v1744
        %v1809 = vadd.f32 %v1681, %v1745
        %v1810 = vadd.f32 %v1682, %v1746
        %v1811 = vadd.f32 %v1683, %v1747
        %v1812 = vadd.f32 %v1684, %v1748
        %v1813 = vadd.f32 %v1685, %v1749
        %v1814 = vadd.f32 %v1686, %v1750
        %v1815 = vadd.f32 %v1687, %v1751
        %v1816 = vadd.f32 %v1688, %v1752
        %v1817 = vadd.f32 %v1689, %v1753
        %v1818 = vadd.f32 %v1690, %v1754
        %v1819 = vadd.f32 %v1691, %v1755
        %v1820 = vadd.f32 %v1692, %v1756
        %v1821 = vadd.f32 %v1693, %v1757
        %v1822 = vadd.f32 %v1694, %v1758
        %v1823 = vadd.f32 %v1695, %v1759
        %v1824 = vadd.f32 %v1696, %v1760
        %v1825 = vadd.f32 %v1697, %v1761
        %v1826 = vadd.f32 %v1698, %v1762
        %v1827 = vadd.f32 %v1699, %v1763
        %v1828 = vadd.f32 %v1700, %v1764
        %v1829 = vadd.f32 %v1701, %v1765
        %v1830 = vadd.f32 %v1702, %v1766
        %v1831 = vadd.f32 %v1703, %v1767
        %v1832 = vadd.f32 %v1704, %v1768
        %v1833 = vadd.f32 %v1705, %v1769
        %v1834 = vadd.f32 %v1706, %v1770
        %v1835 = vadd.f32 %v1707, %v1771
        %v1836 = vadd.f32 %v1708, %v1772
        %v1837 = vadd.f32 %v1709, %v1773
        %v1838 = vadd.f32 %v1710, %v1774
        %v1839 = vadd.f32 %v1711, %v1775
        %v1840 = vadd.f32 %v1712, %v1776
        %v1841 = vmul.f32 %v631, %v631
        %v1842 = vmul.f32 %v632, %v632
        %v1843 = vmul.f32 %v633, %v633
        %v1844 = vmul.f32 %v634, %v634
        %v1845 = vmul.f32 %v635, %v635
        %v1846 = vmul.f32 %v636, %v636
        %v1847 = vmul.f32 %v637, %v637
        %v1848 = vmul.f32 %v638, %v638
        %v1849 = vmul.f32 %v639, %v639
        %v1850 = vmul.f32 %v640, %v640
        %v1851 = vmul.f32 %v641, %v641
        %v1852 = vmul.f32 %v642, %v642
        %v1853 = vmul.f32 %v643, %v643
        %v1854 = vmul.f32 %v644, %v644
        %v1855 = vmul.f32 %v645, %v645
        %v1856 = vmul.f32 %v646, %v646
        %v1857 = vmul.f32 %v647, %v647
        %v1858 = vmul.f32 %v648, %v648
        %v1859 = vmul.f32 %v649, %v649
        %v1860 = vmul.f32 %v650, %v650
        %v1861 = vmul.f32 %v651, %v651
        %v1862 = vmul.f32 %v652, %v652
        %v1863 = vmul.f32 %v653, %v653
        %v1864 = vmul.f32 %v654, %v654
        %v1865 = vmul.f32 %v655, %v655
        %v1866 = vmul.f32 %v656, %v656
        %v1867 = vmul.f32 %v657, %v657
        %v1868 = vmul.f32 %v658, %v658
        %v1869 = vmul.f32 %v659, %v659
        %v1870 = vmul.f32 %v660, %v660
        %v1871 = vmul.f32 %v661, %v661
        %v1872 = vmul.f32 %v662, %v662
        %v1873 = vmul.f32 %v663, %v663
        %v1874 = vmul.f32 %v664, %v664
        %v1875 = vmul.f32 %v665, %v665
        %v1876 = vmul.f32 %v666, %v666
        %v1877 = vmul.f32 %v667, %v667
        %v1878 = vmul.f32 %v668, %v668
        %v1879 = vmul.f32 %v669, %v669
        %v1880 = vmul.f32 %v670, %v670
        %v1881 = vmul.f32 %v671, %v671
        %v1882 = vmul.f32 %v672, %v672
        %v1883 = vmul.f32 %v673, %v673
        %v1884 = vmul.f32 %v674, %v674
        %v1885 = vmul.f32 %v675, %v675
        %v1886 = vmul.f32 %v676, %v676
        %v1887 = vmul.f32 %v677, %v677
        %v1888 = vmul.f32 %v678, %v678
        %v1889 = vmul.f32 %v679, %v679
        %v1890 = vmul.f32 %v680, %v680
        %v1891 = vmul.f32 %v681, %v681
        %v1892 = vmul.f32 %v682, %v682
        %v1893 = vmul.f32 %v683, %v683
        %v1894 = vmul.f32 %v684, %v684
        %v1895 = vmul.f32 %v685, %v685
        %v1896 = vmul.f32 %v686, %v686
        %v1897 = vmul.f32 %v687, %v687
        %v1898 = vmul.f32 %v688, %v688
        %v1899 = vmul.f32 %v689, %v689
        %v1900 = vmul.f32 %v690, %v690
        %v1901 = vmul.f32 %v691, %v691
        %v1902 = vmul.f32 %v692, %v692
        %v1903 = vmul.f32 %v693, %v693
        %v1904 = vmul.f32 %v694, %v694
        %v1905 = vadd.f32 %v1777, %v1841
        %v1906 = vadd.f32 %v1778, %v1842
        %v1907 = vadd.f32 %v1779, %v1843
        %v1908 = vadd.f32 %v1780, %v1844
        %v1909 = vadd.f32 %v1781, %v1845
        %v1910 = vadd.f32 %v1782, %v1846
        %v1911 = vadd.f32 %v1783, %v1847
        %v1912 = vadd.f32 %v1784, %v1848
        %v1913 = vadd.f32 %v1785, %v1849
        %v1914 = vadd.f32 %v1786, %v1850
        %v1915 = vadd.f32 %v1787, %v1851
        %v1916 = vadd.f32 %v1788, %v1852
        %v1917 = vadd.f32 %v1789, %v1853
        %v1918 = vadd.f32 %v1790, %v1854
        %v1919 = vadd.f32 %v1791, %v1855
        %v1920 = vadd.f32 %v1792, %v1856
        %v1921 = vadd.f32 %v1793, %v1857
        %v1922 = vadd.f32 %v1794, %v1858
        %v1923 = vadd.f32 %v1795, %v1859
        %v1924 = vadd.f32 %v1796, %v1860
        %v1925 = vadd.f32 %v1797, %v1861
        %v1926 = vadd.f32 %v1798, %v1862
        %v1927 = vadd.f32 %v1799, %v1863
        %v1928 = vadd.f32 %v1800, %v1864
        %v1929 = vadd.f32 %v1801, %v1865
        %v1930 = vadd.f32 %v1802, %v1866
        %v1931 = vadd.f32 %v1803, %v1867
        %v1932 = vadd.f32 %v1804, %v1868
        %v1933 = vadd.f32 %v1805, %v1869
        %v1934 = vadd.f32 %v1806, %v1870
        %v1935 = vadd.f32 %v1807, %v1871
        %v1936 = vadd.f32 %v1808, %v1872
        %v1937 = vadd.f32 %v1809, %v1873
        %v1938 = vadd.f32 %v1810, %v1874
        %v1939 = vadd.f32 %v1811, %v1875
        %v1940 = vadd.f32 %v1812, %v1876
        %v1941 = vadd.f32 %v1813, %v1877
        %v1942 = vadd.f32 %v1814, %v1878
        %v1943 = vadd.f32 %v1815, %v1879
        %v1944 = vadd.f32 %v1816, %v1880
        %v1945 = vadd.f32 %v1817, %v1881
        %v1946 = vadd.f32 %v1818, %v1882
        %v1947 = vadd.f32 %v1819, %v1883
        %v1948 = vadd.f32 %v1820, %v1884
        %v1949 = vadd.f32 %v1821, %v1885
        %v1950 = vadd.f32 %v1822, %v1886
        %v1951 = vadd.f32 %v1823, %v1887
        %v1952 = vadd.f32 %v1824, %v1888
        %v1953 = vadd.f32 %v1825, %v1889
        %v1954 = vadd.f32 %v1826, %v1890
        %v1955 = vadd.f32 %v1827, %v1891
        %v1956 = vadd.f32 %v1828, %v1892
        %v1957 = vadd.f32 %v1829, %v1893
        %v1958 = vadd.f32 %v1830, %v1894
        %v1959 = vadd.f32 %v1831, %v1895
        %v1960 = vadd.f32 %v1832, %v1896
        %v1961 = vadd.f32 %v1833, %v1897
        %v1962 = vadd.f32 %v1834, %v1898
        %v1963 = vadd.f32 %v1835, %v1899
        %v1964 = vadd.f32 %v1836, %v1900
        %v1965 = vadd.f32 %v1837, %v1901
        %v1966 = vadd.f32 %v1838, %v1902
        %v1967 = vadd.f32 %v1839, %v1903
        %v1968 = vadd.f32 %v1840, %v1904
        %v1969 = vmul.f32 %v1905, -0.0078125
        %v1970 = vmul.f32 %v1906, -0.0078125
        %v1971 = vmul.f32 %v1907, -0.0078125
        %v1972 = vmul.f32 %v1908, -0.0078125
        %v1973 = vmul.f32 %v1909, -0.0078125
        %v1974 = vmul.f32 %v1910, -0.0078125
        %v1975 = vmul.f32 %v1911, -0.0078125
        %v1976 = vmul.f32 %v1912, -0.0078125
        %v1977 = vmul.f32 %v1913, -0.0078125
        %v1978 = vmul.f32 %v1914, -0.0078125
        %v1979 = vmul.f32 %v1915, -0.0078125
        %v1980 = vmul.f32 %v1916, -0.0078125
        %v1981 = vmul.f32 %v1917, -0.0078125
        %v1982 = vmul.f32 %v1918, -0.0078125
        %v1983 = vmul.f32 %v1919, -0.0078125
        %v1984 = vmul.f32 %v1920, -0.0078125
        %v1985 = vmul.f32 %v1921, -0.0078125
        %v1986 = vmul.f32 %v1922, -0.0078125
        %v1987 = vmul.f32 %v1923, -0.0078125
        %v1988 = vmul.f32 %v1924, -0.0078125
        %v1989 = vmul.f32 %v1925, -0.0078125
        %v1990 = vmul.f32 %v1926, -0.0078125
        %v1991 = vmul.f32 %v1927, -0.0078125
        %v1992 = vmul.f32 %v1928, -0.0078125
        %v1993 = vmul.f32 %v1929, -0.0078125
        %v1994 = vmul.f32 %v1930, -0.0078125
        %v1995 = vmul.f32 %v1931, -0.0078125
        %v1996 = vmul.f32 %v1932, -0.0078125
        %v1997 = vmul.f32 %v1933, -0.0078125
        %v1998 = vmul.f32 %v1934, -0.0078125
        %v1999 = vmul.f32 %v1935, -0.0078125
        %v2000 = vmul.f32 %v1936, -0.0078125
        %v2001 = vmul.f32 %v1937, -0.0078125
        %v2002 = vmul.f32 %v1938, -0.0078125
        %v2003 = vmul.f32 %v1939, -0.0078125
        %v2004 = vmul.f32 %v1940, -0.0078125
        %v2005 = vmul.f32 %v1941, -0.0078125
        %v2006 = vmul.f32 %v1942, -0.0078125
        %v2007 = vmul.f32 %v1943, -0.0078125
        %v2008 = vmul.f32 %v1944, -0.0078125
        %v2009 = vmul.f32 %v1945, -0.0078125
        %v2010 = vmul.f32 %v1946, -0.0078125
        %v2011 = vmul.f32 %v1947, -0.0078125
        %v2012 = vmul.f32 %v1948, -0.0078125
        %v2013 = vmul.f32 %v1949, -0.0078125
        %v2014 = vmul.f32 %v1950, -0.0078125
        %v2015 = vmul.f32 %v1951, -0.0078125
        %v2016 = vmul.f32 %v1952, -0.0078125
        %v2017 = vmul.f32 %v1953, -0.0078125
        %v2018 = vmul.f32 %v1954, -0.0078125
        %v2019 = vmul.f32 %v1955, -0.0078125
        %v2020 = vmul.f32 %v1956, -0.0078125
        %v2021 = vmul.f32 %v1957, -0.0078125
        %v2022 = vmul.f32 %v1958, -0.0078125
        %v2023 = vmul.f32 %v1959, -0.0078125
        %v2024 = vmul.f32 %v1960, -0.0078125
        %v2025 = vmul.f32 %v1961, -0.0078125
        %v2026 = vmul.f32 %v1962, -0.0078125
        %v2027 = vmul.f32 %v1963, -0.0078125
        %v2028 = vmul.f32 %v1964, -0.0078125
        %v2029 = vmul.f32 %v1965, -0.0078125
        %v2030 = vmul.f32 %v1966, -0.0078125
        %v2031 = vmul.f32 %v1967, -0.0078125
        %v2032 = vmul.f32 %v1968, -0.0078125
        %v2033 = vmul.f32 %v1969, 1.442695
        %v2034 = vpow.pop %v2033
        %v2035 = vmul.f32 %v1970, 1.442695
        %v2036 = vpow.pop %v2035
        %v2037 = vmul.f32 %v1971, 1.442695
        %v2038 = vpow.pop %v2037
        %v2039 = vmul.f32 %v1972, 1.442695
        %v2040 = vpow.pop %v2039
        %v2041 = vmul.f32 %v1973, 1.442695
        %v2042 = vpow.pop %v2041
        %v2043 = vmul.f32 %v1974, 1.442695
        %v2044 = vpow.pop %v2043
        %v2045 = vmul.f32 %v1975, 1.442695
        %v2046 = vpow.pop %v2045
        %v2047 = vmul.f32 %v1976, 1.442695
        %v2048 = vpow.pop %v2047
        %v2049 = vmul.f32 %v1977, 1.442695
        %v2050 = vpow.pop %v2049
        %v2051 = vmul.f32 %v1978, 1.442695
        %v2052 = vpow.pop %v2051
        %v2053 = vmul.f32 %v1979, 1.442695
        %v2054 = vpow.pop %v2053
        %v2055 = vmul.f32 %v1980, 1.442695
        %v2056 = vpow.pop %v2055
        %v2057 = vmul.f32 %v1981, 1.442695
        %v2058 = vpow.pop %v2057
        %v2059 = vmul.f32 %v1982, 1.442695
        %v2060 = vpow.pop %v2059
        %v2061 = vmul.f32 %v1983, 1.442695
        %v2062 = vpow.pop %v2061
        %v2063 = vmul.f32 %v1984, 1.442695
        %v2064 = vpow.pop %v2063
        %v2065 = vmul.f32 %v1985, 1.442695
        %v2066 = vpow.pop %v2065
        %v2067 = vmul.f32 %v1986, 1.442695
        %v2068 = vpow.pop %v2067
        %v2069 = vmul.f32 %v1987, 1.442695
        %v2070 = vpow.pop %v2069
        %v2071 = vmul.f32 %v1988, 1.442695
        %v2072 = vpow.pop %v2071
        %v2073 = vmul.f32 %v1989, 1.442695
        %v2074 = vpow.pop %v2073
        %v2075 = vmul.f32 %v1990, 1.442695
        %v2076 = vpow.pop %v2075
        %v2077 = vmul.f32 %v1991, 1.442695
        %v2078 = vpow.pop %v2077
        %v2079 = vmul.f32 %v1992, 1.442695
        %v2080 = vpow.pop %v2079
        %v2081 = vmul.f32 %v1993, 1.442695
        %v2082 = vpow.pop %v2081
        %v2083 = vmul.f32 %v1994, 1.442695
        %v2084 = vpow.pop %v2083
        %v2085 = vmul.f32 %v1995, 1.442695
        %v2086 = vpow.pop %v2085
        %v2087 = vmul.f32 %v1996, 1.442695
        %v2088 = vpow.pop %v2087
        %v2089 = vmul.f32 %v1997, 1.442695
        %v2090 = vpow.pop %v2089
        %v2091 = vmul.f32 %v1998, 1.442695
        %v2092 = vpow.pop %v2091
        %v2093 = vmul.f32 %v1999, 1.442695
        %v2094 = vpow.pop %v2093
        %v2095 = vmul.f32 %v2000, 1.442695
        %v2096 = vpow.pop %v2095
        %v2097 = vmul.f32 %v2001, 1.442695
        %v2098 = vpow.pop %v2097
        %v2099 = vmul.f32 %v2002, 1.442695
        %v2100 = vpow.pop %v2099
        %v2101 = vmul.f32 %v2003, 1.442695
        %v2102 = vpow.pop %v2101
        %v2103 = vmul.f32 %v2004, 1.442695
        %v2104 = vpow.pop %v2103
        %v2105 = vmul.f32 %v2005, 1.442695
        %v2106 = vpow.pop %v2105
        %v2107 = vmul.f32 %v2006, 1.442695
        %v2108 = vpow.pop %v2107
        %v2109 = vmul.f32 %v2007, 1.442695
        %v2110 = vpow.pop %v2109
        %v2111 = vmul.f32 %v2008, 1.442695
        %v2112 = vpow.pop %v2111
        %v2113 = vmul.f32 %v2009, 1.442695
        %v2114 = vpow.pop %v2113
        %v2115 = vmul.f32 %v2010, 1.442695
        %v2116 = vpow.pop %v2115
        %v2117 = vmul.f32 %v2011, 1.442695
        %v2118 = vpow.pop %v2117
        %v2119 = vmul.f32 %v2012, 1.442695
        %v2120 = vpow.pop %v2119
        %v2121 = vmul.f32 %v2013, 1.442695
        %v2122 = vpow.pop %v2121
        %v2123 = vmul.f32 %v2014, 1.442695
        %v2124 = vpow.pop %v2123
        %v2125 = vmul.f32 %v2015, 1.442695
        %v2126 = vpow.pop %v2125
        %v2127 = vmul.f32 %v2016, 1.442695
        %v2128 = vpow.pop %v2127
        %v2129 = vmul.f32 %v2017, 1.442695
        %v2130 = vpow.pop %v2129
        %v2131 = vmul.f32 %v2018, 1.442695
        %v2132 = vpow.pop %v2131
        %v2133 = vmul.f32 %v2019, 1.442695
        %v2134 = vpow.pop %v2133
        %v2135 = vmul.f32 %v2020, 1.442695
        %v2136 = vpow.pop %v2135
        %v2137 = vmul.f32 %v2021, 1.442695
        %v2138 = vpow.pop %v2137
        %v2139 = vmul.f32 %v2022, 1.442695
        %v2140 = vpow.pop %v2139
        %v2141 = vmul.f32 %v2023, 1.442695
        %v2142 = vpow.pop %v2141
        %v2143 = vmul.f32 %v2024, 1.442695
        %v2144 = vpow.pop %v2143
        %v2145 = vmul.f32 %v2025, 1.442695
        %v2146 = vpow.pop %v2145
        %v2147 = vmul.f32 %v2026, 1.442695
        %v2148 = vpow.pop %v2147
        %v2149 = vmul.f32 %v2027, 1.442695
        %v2150 = vpow.pop %v2149
        %v2151 = vmul.f32 %v2028, 1.442695
        %v2152 = vpow.pop %v2151
        %v2153 = vmul.f32 %v2029, 1.442695
        %v2154 = vpow.pop %v2153
        %v2155 = vmul.f32 %v2030, 1.442695
        %v2156 = vpow.pop %v2155
        %v2157 = vmul.f32 %v2031, 1.442695
        %v2158 = vpow.pop %v2157
        %v2159 = vmul.f32 %v2032, 1.442695
        %v2160 = vpow.pop %v2159
        %v2161 = vld [vmem:[%s206] sm:$0x3]
        %v2162 = vsel %vm951, %v2034, 0.0
        %v2163 = vsel %vm952, %v2036, 0.0
        %v2164 = vsel %vm953, %v2038, 0.0
        %v2165 = vsel %vm954, %v2040, 0.0
        %v2166 = vsel %vm955, %v2042, 0.0
        %v2167 = vsel %vm956, %v2044, 0.0
        %v2168 = vsel %vm957, %v2046, 0.0
        %v2169 = vsel %vm958, %v2048, 0.0
        %v2170 = vsel %vm959, %v2050, 0.0
        %v2171 = vsel %vm960, %v2052, 0.0
        %v2172 = vsel %vm961, %v2054, 0.0
        %v2173 = vsel %vm962, %v2056, 0.0
        %v2174 = vsel %vm963, %v2058, 0.0
        %v2175 = vsel %vm964, %v2060, 0.0
        %v2176 = vsel %vm965, %v2062, 0.0
        %v2177 = vsel %vm966, %v2064, 0.0
        %v2178 = vsel %vm967, %v2066, 0.0
        %v2179 = vsel %vm968, %v2068, 0.0
        %v2180 = vsel %vm969, %v2070, 0.0
        %v2181 = vsel %vm970, %v2072, 0.0
        %v2182 = vsel %vm971, %v2074, 0.0
        %v2183 = vsel %vm972, %v2076, 0.0
        %v2184 = vsel %vm973, %v2078, 0.0
        %v2185 = vsel %vm974, %v2080, 0.0
        %v2186 = vsel %vm975, %v2082, 0.0
        %v2187 = vsel %vm976, %v2084, 0.0
        %v2188 = vsel %vm977, %v2086, 0.0
        %v2189 = vsel %vm978, %v2088, 0.0
        %v2190 = vsel %vm979, %v2090, 0.0
        %v2191 = vsel %vm980, %v2092, 0.0
        %v2192 = vsel %vm981, %v2094, 0.0
        %v2193 = vsel %vm982, %v2096, 0.0
        %v2194 = vsel %vm983, %v2098, 0.0
        %v2195 = vsel %vm984, %v2100, 0.0
        %v2196 = vsel %vm985, %v2102, 0.0
        %v2197 = vsel %vm986, %v2104, 0.0
        %v2198 = vsel %vm987, %v2106, 0.0
        %v2199 = vsel %vm988, %v2108, 0.0
        %v2200 = vsel %vm989, %v2110, 0.0
        %v2201 = vsel %vm990, %v2112, 0.0
        %v2202 = vsel %vm991, %v2114, 0.0
        %v2203 = vsel %vm992, %v2116, 0.0
        %v2204 = vsel %vm993, %v2118, 0.0
        %v2205 = vsel %vm994, %v2120, 0.0
        %v2206 = vsel %vm995, %v2122, 0.0
        %v2207 = vsel %vm996, %v2124, 0.0
        %v2208 = vsel %vm997, %v2126, 0.0
        %v2209 = vsel %vm998, %v2128, 0.0
        %v2210 = vsel %vm999, %v2130, 0.0
        %v2211 = vsel %vm1000, %v2132, 0.0
        %v2212 = vsel %vm1001, %v2134, 0.0
        %v2213 = vsel %vm1002, %v2136, 0.0
        %v2214 = vsel %vm1003, %v2138, 0.0
        %v2215 = vsel %vm1004, %v2140, 0.0
        %v2216 = vsel %vm1005, %v2142, 0.0
        %v2217 = vsel %vm1006, %v2144, 0.0
        %v2218 = vsel %vm1007, %v2146, 0.0
        %v2219 = vsel %vm1008, %v2148, 0.0
        %v2220 = vsel %vm1009, %v2150, 0.0
        %v2221 = vsel %vm1010, %v2152, 0.0
        %v2222 = vsel %vm1011, %v2154, 0.0
        %v2223 = vsel %vm1012, %v2156, 0.0
        %v2224 = vsel %vm1013, %v2158, 0.0
        %v2225 = vsel %vm1014, %v2160, 0.0
        %v2226 = vadd.f32 %v2162, %v2164
        %v2227 = vadd.f32 %v2226, %v2166
        %v2228 = vadd.f32 %v2227, %v2168
        %v2229 = vadd.f32 %v2228, %v2170
        %v2230 = vadd.f32 %v2229, %v2172
        %v2231 = vadd.f32 %v2230, %v2174
        %v2232 = vadd.f32 %v2231, %v2176
        %v2233 = vadd.f32 %v2232, %v2178
        %v2234 = vadd.f32 %v2233, %v2180
        %v2235 = vadd.f32 %v2234, %v2182
        %v2236 = vadd.f32 %v2235, %v2184
        %v2237 = vadd.f32 %v2236, %v2186
        %v2238 = vadd.f32 %v2237, %v2188
        %v2239 = vadd.f32 %v2238, %v2190
        %v2240 = vadd.f32 %v2239, %v2192
        %v2241 = vadd.f32 %v2240, %v2194
        %v2242 = vadd.f32 %v2241, %v2196
        %v2243 = vadd.f32 %v2242, %v2198
        %v2244 = vadd.f32 %v2243, %v2200
        %v2245 = vadd.f32 %v2244, %v2202
        %v2246 = vadd.f32 %v2245, %v2204
        %v2247 = vadd.f32 %v2246, %v2206
        %v2248 = vadd.f32 %v2247, %v2208
        %v2249 = vadd.f32 %v2248, %v2210
        %v2250 = vadd.f32 %v2249, %v2212
        %v2251 = vadd.f32 %v2250, %v2214
        %v2252 = vadd.f32 %v2251, %v2216
        %v2253 = vadd.f32 %v2252, %v2218
        %v2254 = vadd.f32 %v2253, %v2220
        %v2255 = vadd.f32 %v2254, %v2222
        %v2256 = vadd.f32 %v2255, %v2224
        %v2257 = vrot.slane %v2256, 4
        %v2258 = vadd.f32 %v2256, %v2257
        %v2259 = vrot.slane %v2258, 2
        %v2260 = vadd.f32 %v2258, %v2259
        %v2261 = vrot.slane %v2260, 1
        %v2262 = vadd.f32 %v2260, %v2261
        %v2263 = vadd.f32 %v2163, %v2165
        %v2264 = vadd.f32 %v2263, %v2167
        %v2265 = vadd.f32 %v2264, %v2169
        %v2266 = vadd.f32 %v2265, %v2171
        %v2267 = vadd.f32 %v2266, %v2173
        %v2268 = vadd.f32 %v2267, %v2175
        %v2269 = vadd.f32 %v2268, %v2177
        %v2270 = vadd.f32 %v2269, %v2179
        %v2271 = vadd.f32 %v2270, %v2181
        %v2272 = vadd.f32 %v2271, %v2183
        %v2273 = vadd.f32 %v2272, %v2185
        %v2274 = vadd.f32 %v2273, %v2187
        %v2275 = vadd.f32 %v2274, %v2189
        %v2276 = vadd.f32 %v2275, %v2191
        %v2277 = vadd.f32 %v2276, %v2193
        %v2278 = vadd.f32 %v2277, %v2195
        %v2279 = vadd.f32 %v2278, %v2197
        %v2280 = vadd.f32 %v2279, %v2199
        %v2281 = vadd.f32 %v2280, %v2201
        %v2282 = vadd.f32 %v2281, %v2203
        %v2283 = vadd.f32 %v2282, %v2205
        %v2284 = vadd.f32 %v2283, %v2207
        %v2285 = vadd.f32 %v2284, %v2209
        %v2286 = vadd.f32 %v2285, %v2211
        %v2287 = vadd.f32 %v2286, %v2213
        %v2288 = vadd.f32 %v2287, %v2215
        %v2289 = vadd.f32 %v2288, %v2217
        %v2290 = vadd.f32 %v2289, %v2219
        %v2291 = vadd.f32 %v2290, %v2221
        %v2292 = vadd.f32 %v2291, %v2223
        %v2293 = vadd.f32 %v2292, %v2225
        %v2294 = vrot.slane %v2293, 4
        %v2295 = vadd.f32 %v2293, %v2294
        %v2296 = vrot.slane %v2295, 2
        %v2297 = vadd.f32 %v2295, %v2296
        %v2298 = vrot.slane %v2297, 1
        %v2299 = vadd.f32 %v2297, %v2298
        %v2302 = vrot.slane %v2299, 7
        %vm2303 = vcmask 1040384
        %v2304 = vsel %vm2303, %v2262, %v2302
        %v2306 = vadd.f32 %v2161, %v2304
        %v2307 = vlaneseq
        %vm2308 = vcmp.ge.s32.totalorder %v2307, 0
        %vm2309 = vcmp.lt.s32.totalorder %v2307, 256
        %vm2310 = vmand %vm2308, %vm2309
        %2311 = vst.msk [vmem:[%s206] sm:$0x3] %vm2310, %v2306
        %s2312 = sand.u32 %s107, 1
        %s2313 = scalar_lea.sflag [#allocation5], %s2312
        %s2314 = sand.u32 %s107, 1
        %s2315 = smul.addr %s2314, 2
        %s2316 = scalar_lea.vmem [#allocation4], %s2315
        // Predicated region
        $region33: #{tpu_custom_call.1} parent=27 // pred_check
          %p2317 = pneg %p117
        $region34: #{tpu_custom_call.1} parent=27 // pred_check_branch
          %2319 = sbr.rel (%p2317) target = $region36
        $region35: #{tpu_custom_call.1} parent=27 // pred_region
          %s2320 = smul.u32 2, %s24
          %2322 = vsyncadd %s2313, 0
          %s2323 = smul.addr %s23, 2
          %s2324 = sadd.s32 %s2320, %s2323
          %s2325 = scalar_lea.hbm %s3, %s2324
          %s2327 = sshll.u32 %s2316, 4
          %s2328 = int_to_ptr.vmem [resolvable:$true] %s2327
          %s2329 = sshll.u32 %s2325, 4
          %s2330 = int_to_ptr.hbm [resolvable:$true] %s2329
          %2332 = dma.vmem_to_hbm [thread:$0]  %s2328, 32, %s2330, %s2313
        $region36: #{tpu_custom_call.1} parent=27 // pred_fallthru
          _
      $region28: #{tpu_custom_call.1} parent=5 // pred_fallthru
        _
      %p2333 = scmp.le.s32.totalorder 2, %s13
      // Predicated region
      $region37: #{tpu_custom_call.1} parent=5 // pred_check
        %p2334 = pneg %p2333
      $region38: #{tpu_custom_call.1} parent=5 // pred_check_branch
        %2336 = sbr.rel (%p2334) target = $region40
      $region39: #{tpu_custom_call.1} parent=5 // pred_region
        %s2337 = ssub.s32 %s13, 2
        // Predicated region
        $region41: #{tpu_custom_call.1} parent=39 // pred_check
          %p2338 = pneg %p123
        $region42: #{tpu_custom_call.1} parent=39 // pred_check_branch
          %2340 = sbr.rel (%p2338) target = $region44
        $region43: #{tpu_custom_call.1} parent=39 // pred_region
          %s2341 = sand.u32 %s108, 1
          %s2342 = scalar_lea.sflag [#allocation5], %s2341
          %s2343 = sand.u32 %s108, 1
          %s2344 = smul.addr %s2343, 2
          %s2345 = scalar_lea.vmem [#allocation4], %s2344
          %2347 = dma.done %s2342, 32
        $region44: #{tpu_custom_call.1} parent=39 // pred_fallthru
          _
      $region40: #{tpu_custom_call.1} parent=5 // pred_fallthru
        _
    $region6: #{tpu_custom_call.1} parent=1 // loop_footer
      %s17 = sadd.s32 1, %s13
    $region7: #{tpu_custom_call.1} parent=1 // loop_footer_branch
      %12 = sbr.rel target = $region3
    $region8: #{tpu_custom_call.1} parent=1 // loop_exit
      _
    %2348 = vsyncpa [#allocation5], 1
    %s2349 = scalar_lea.sflag [#allocation5], 1
    %2350 = vsyncpa %s2349, 1

</llo_original>
